<compile_context>
chip_gen: v5e
topology: v5e:2x2
jax: 0.10.0
libtpu: 0.0.40
codegen_flags: <defaults>
</compile_context>

<pallas_src>
import math

import jax
import jax.numpy as jnp
import numpy as np
from jax.experimental import pallas as pl
from jax.experimental.pallas import tpu as pltpu

# ---- module hyper-parameters (consistent with the PyTorch module) -----------
EMBED_DIM = 32          # embedding_dim
NUM_HEADS = 2           # num_heads
MLP_DIM = 64            # mlp_dim
DOWNSAMPLE = 2          # attention_downsample_rate
D_CROSS = EMBED_DIM // DOWNSAMPLE   # internal dim of the cross attentions
NQ = 8                  # sparse (prompt token) sequence length
NK = 16                 # dense (image token) sequence length
BATCH = 2
SKIP_FIRST_LAYER_PE = False
EPS = 1e-5              # nn.LayerNorm default eps
N_PARAMS = 36


# ----------------------- static packed-parameter layout -----------------------
def _build_plans():
    """Static layout of the two parameter slabs (computed once at import)."""
    w_plan = [
        # name,      rows,         cols
        ("sa_q",   EMBED_DIM,      EMBED_DIM),        # (32, 32)
        ("sa_kv",  2 * EMBED_DIM,  2 * EMBED_DIM),    # (64, 64) block-diag
        ("sa_o",   EMBED_DIM,      EMBED_DIM),        # (32, 32)
        ("t2i_q",  EMBED_DIM,      D_CROSS),          # (32, 16)
        ("t2i_kv", 2 * EMBED_DIM,  2 * D_CROSS),      # (64, 32) block-diag
        ("t2i_o",  D_CROSS,        EMBED_DIM),        # (16, 32)
        ("mlp_1",  EMBED_DIM,      MLP_DIM),          # (32, 64)
        ("mlp_2",  MLP_DIM,        EMBED_DIM),        # (64, 32)
        ("i2t_q",  EMBED_DIM,      D_CROSS),
        ("i2t_kv", 2 * EMBED_DIM,  2 * D_CROSS),
        ("i2t_o",  D_CROSS,        EMBED_DIM),
    ]
    w_entries, off = {}, 0
    for name, r, c in w_plan:
        w_entries[name] = (off, r, c)      # all row offsets are multiples of 8
        off += r

    v_plan = [
        ("sa_bq", EMBED_DIM), ("sa_bkv", 2 * EMBED_DIM), ("sa_bo", EMBED_DIM),
        ("n1_g", EMBED_DIM), ("n1_b", EMBED_DIM),
        ("t2i_bq", D_CROSS), ("t2i_bkv", 2 * D_CROSS), ("t2i_bo", EMBED_DIM),
        ("n2_g", EMBED_DIM), ("n2_b", EMBED_DIM),
        ("mlp_b1", MLP_DIM), ("mlp_b2", EMBED_DIM),
        ("n3_g", EMBED_DIM), ("n3_b", EMBED_DIM),
        ("n4_g", EMBED_DIM), ("n4_b", EMBED_DIM),
        ("i2t_bq", D_CROSS), ("i2t_bkv", 2 * D_CROSS), ("i2t_bo", EMBED_DIM),
    ]
    v_entries = {name: (i, c) for i, (name, c) in enumerate(v_plan)}
    return w_entries, off, v_entries, len(v_plan)


W_ENTRIES, W_ROWS, V_ENTRIES, _V_USED = _build_plans()
W_COLS = 64
V_COLS = 64
V_ROWS = -(-_V_USED // 8) * 8     # pad the vector slab rows to a sublane multiple


# ----------------------------- parameter init ---------------------------------
def _linear_params(key, in_dim, out_dim):
    # torch nn.Linear default init: U(-1/sqrt(in), 1/sqrt(in)); stored (in, out)
    kw, kb = jax.random.split(key)
    bound = 1.0 / math.sqrt(in_dim)
    w = jax.random.uniform(kw, (in_dim, out_dim), jnp.float32, -bound, bound)
    b = jax.random.uniform(kb, (1, out_dim), jnp.float32, -bound, bound)
    return w, b


def _attn_params(key, embed_dim, kv_in_dim, internal_dim):
    ks = jax.random.split(key, 4)
    qw, qb = _linear_params(ks[0], embed_dim, internal_dim)
    kw, kb = _linear_params(ks[1], kv_in_dim, internal_dim)
    vw, vb = _linear_params(ks[2], kv_in_dim, internal_dim)
    ow, ob = _linear_params(ks[3], internal_dim, embed_dim)
    return [qw, qb, kw, kb, vw, vb, ow, ob]


def _ln_params(dim):
    return [jnp.ones((1, dim), jnp.float32), jnp.zeros((1, dim), jnp.float32)]


def make_params(key):
    ks = jax.random.split(key, 5)
    params = []
    params += _attn_params(ks[0], EMBED_DIM, EMBED_DIM, EMBED_DIM)       # self_attn
    params += _ln_params(EMBED_DIM)                                      # norm1
    params += _attn_params(ks[1], EMBED_DIM, EMBED_DIM, D_CROSS)         # cross t->i
    params += _ln_params(EMBED_DIM)                                      # norm2
    w1, b1 = _linear_params(ks[2], EMBED_DIM, MLP_DIM)
    w2, b2 = _linear_params(ks[3], MLP_DIM, EMBED_DIM)
    params += [w1, b1, w2, b2]                                           # mlp
    params += _ln_params(EMBED_DIM)                                      # norm3
    params += _ln_params(EMBED_DIM)                                      # norm4
    params += _attn_params(ks[4], EMBED_DIM, EMBED_DIM, D_CROSS)         # cross i->t
    assert len(params) == N_PARAMS
    return params


def pack_params(params):
    """One-time HOST-SIDE packing (outside jit) of the 36 tensors into two slabs.

    Weight slab: (448, 64) f32, with K/V projection weights stored block-
    diagonally so [k_in | v_in] @ W_kv = [k | v] in a single matmul.
    Vector slab: (24, 64) f32, one bias / LayerNorm vector per row.
    """
    assert len(params) == N_PARAMS
    (sa_qw, sa_qb, sa_kw, sa_kb, sa_vw, sa_vb, sa_ow, sa_ob,
     n1g, n1b,
     t2i_qw, t2i_qb, t2i_kw, t2i_kb, t2i_vw, t2i_vb, t2i_ow, t2i_ob,
     n2g, n2b,
     mlp_w1, mlp_b1, mlp_w2, mlp_b2,
     n3g, n3b, n4g, n4b,
     i2t_qw, i2t_qb, i2t_kw, i2t_kb, i2t_vw, i2t_vb, i2t_ow, i2t_ob) = [
         np.asarray(t, dtype=np.float32) for t in params]

    wslab = np.zeros((W_ROWS, W_COLS), np.float32)
    vslab = np.zeros((V_ROWS, V_COLS), np.float32)

    def put_w(name, mat):
        off, r, c = W_ENTRIES[name]
        assert mat.shape == (r, c)
        wslab[off:off + r, :c] = mat

    def put_kv(name, kw, vw):
        # block-diagonal [[kw, 0], [0, vw]]
        off, r, c = W_ENTRIES[name]
        ein, dint = kw.shape
        assert r == 2 * ein and c == 2 * dint and vw.shape == kw.shape
        wslab[off:off + ein, :dint] = kw
        wslab[off + ein:off + 2 * ein, dint:2 * dint] = vw

    def put_v(name, vec):
        row, c = V_ENTRIES[name]
        vec = np.asarray(vec).reshape(-1)
        assert vec.shape == (c,)
        vslab[row, :c] = vec

    # self attention
    put_w("sa_q", sa_qw); put_kv("sa_kv", sa_kw, sa_vw); put_w("sa_o", sa_ow)
    put_v("sa_bq", sa_qb)
    put_v("sa_bkv", np.concatenate([sa_kb.reshape(-1), sa_vb.reshape(-1)]))
    put_v("sa_bo", sa_ob)
    put_v("n1_g", n1g); put_v("n1_b", n1b)
    # cross attention tokens -> image
    put_w("t2i_q", t2i_qw); put_kv("t2i_kv", t2i_kw, t2i_vw); put_w("t2i_o", t2i_ow)
    put_v("t2i_bq", t2i_qb)
    put_v("t2i_bkv", np.concatenate([t2i_kb.reshape(-1), t2i_vb.reshape(-1)]))
    put_v("t2i_bo", t2i_ob)
    put_v("n2_g", n2g); put_v("n2_b", n2b)
    # MLP
    put_w("mlp_1", mlp_w1); put_w("mlp_2", mlp_w2)
    put_v("mlp_b1", mlp_b1); put_v("mlp_b2", mlp_b2)
    put_v("n3_g", n3g); put_v("n3_b", n3b); put_v("n4_g", n4g); put_v("n4_b", n4b)
    # cross attention image -> tokens
    put_w("i2t_q", i2t_qw); put_kv("i2t_kv", i2t_kw, i2t_vw); put_w("i2t_o", i2t_ow)
    put_v("i2t_bq", i2t_qb)
    put_v("i2t_bkv", np.concatenate([i2t_kb.reshape(-1), i2t_vb.reshape(-1)]))
    put_v("i2t_bo", i2t_ob)

    return jnp.asarray(wslab), jnp.asarray(vslab)


# --------------------------- in-kernel helpers ---------------------------------
def _w(w_ref, name):
    off, r, c = W_ENTRIES[name]
    return w_ref[off:off + r, :c]            # (in_dim, out_dim), static slice


def _vec(vec_ref, name):
    row, c = V_ENTRIES[name]
    return vec_ref[row:row + 1, :c]          # (1, dim), static slice


def _layernorm(x, vec_ref, name):
    g = _vec(vec_ref, name + "_g")
    b = _vec(vec_ref, name + "_b")
    mu = jnp.mean(x, axis=-1, keepdims=True)
    xc = x - mu
    var = jnp.mean(xc * xc, axis=-1, keepdims=True)
    return xc * jax.lax.rsqrt(var + EPS) * g + b


def _attention(q_in, k_in, v_in, w_ref, vec_ref, name, nq, nk):
    """Fused multi-head attention on batch-folded 2-D slabs.

    q_in: (BATCH*nq, E); k_in / v_in: (BATCH*nk, E).
      * K/V projection = ONE matmul (block-diagonal weight on [k_in | v_in]).
      * Attention core is unrolled per batch / head with static lane slices
        (no head reshape / transpose relayouts).
      * Output projection = ONE matmul on the lane/row-concatenated per-head
        outputs (no per-head result pops + VALU accumulate chain).
    """
    wq = _w(w_ref, name + "_q")              # (E, D)
    wkv = _w(w_ref, name + "_kv")            # (2E, 2D) block-diagonal
    wo = _w(w_ref, name + "_o")              # (D, E)
    bq = _vec(vec_ref, name + "_bq")         # (1, D)
    bkv = _vec(vec_ref, name + "_bkv")       # (1, 2D)
    bo = _vec(vec_ref, name + "_bo")         # (1, E)

    D = W_ENTRIES[name + "_q"][2]
    d = D // NUM_HEADS
    scale = 1.0 / math.sqrt(d)

    q = jnp.dot(q_in, wq, preferred_element_type=jnp.float32) + bq        # (B*nq, D)
    kv_in = jnp.concatenate([k_in, v_in], axis=-1)                        # (B*nk, 2E)
    kv = jnp.dot(kv_in, wkv, preferred_element_type=jnp.float32) + bkv    # (B*nk, 2D)
    k = kv[:, :D]
    v = kv[:, D:2 * D]

    per_batch = []
    for b in range(BATCH):
        qb = q[b * nq:(b + 1) * nq, :]
        kb = k[b * nk:(b + 1) * nk, :]
        vb = v[b * nk:(b + 1) * nk, :]
        heads = []
        for h in range(NUM_HEADS):
            qh = qb[:, h * d:(h + 1) * d]                                 # (nq, d)
            kh = kb[:, h * d:(h + 1) * d]                                 # (nk, d)
            vh = vb[:, h * d:(h + 1) * d]                                 # (nk, d)
            s = jax.lax.dot_general(
                qh, kh, (((1,), (1,)), ((), ())),
                preferred_element_type=jnp.float32) * scale               # (nq, nk)
            s = s - jnp.max(s, axis=-1, keepdims=True)
            e = jnp.exp(s)
            p = e / jnp.sum(e, axis=-1, keepdims=True)   # exact softmax (parity)
            heads.append(jnp.dot(p, vh, preferred_element_type=jnp.float32))
        per_batch.append(jnp.concatenate(heads, axis=-1))                 # (nq, D)
    o = jnp.concatenate(per_batch, axis=0)                                # (B*nq, D)
    return jnp.dot(o, wo, preferred_element_type=jnp.float32) + bo        # (B*nq, E)


def _block_body(queries, keys, query_pe, key_pe, w_ref, vec_ref):
    # (1) self attention of sparse tokens
    if SKIP_FIRST_LAYER_PE:
        queries = _attention(queries, queries, queries, w_ref, vec_ref, "sa", NQ, NQ)
    else:
        q = queries + query_pe
        queries = queries + _attention(q, q, queries, w_ref, vec_ref, "sa", NQ, NQ)
    queries = _layernorm(queries, vec_ref, "n1")

    # (2) cross attention: tokens -> image
    q = queries + query_pe
    k = keys + key_pe
    queries = queries + _attention(q, k, keys, w_ref, vec_ref, "t2i", NQ, NK)
    queries = _layernorm(queries, vec_ref, "n2")

    # (3) MLP (Linear -> ReLU -> Linear)
    h = jnp.maximum(
        jnp.dot(queries, _w(w_ref, "mlp_1"), preferred_element_type=jnp.float32)
        + _vec(vec_ref, "mlp_b1"), 0.0)
    mlp_out = (jnp.dot(h, _w(w_ref, "mlp_2"), preferred_element_type=jnp.float32)
               + _vec(vec_ref, "mlp_b2"))
    queries = _layernorm(queries + mlp_out, vec_ref, "n3")

    # (4) cross attention: image -> tokens
    q = queries + query_pe
    k = keys + key_pe
    keys = keys + _attention(k, q, queries, w_ref, vec_ref, "i2t", NK, NQ)
    keys = _layernorm(keys, vec_ref, "n4")

    return queries, keys


# ------------------------------- Pallas kernel ---------------------------------
def two_way_block_kernel(q_ref, k_ref, qpe_ref, kpe_ref, w_ref, vec_ref,
                         outq_ref, outk_ref):
    queries = q_ref[...]          # (B*NQ, C)
    keys = k_ref[...]             # (B*NK, C)
    query_pe = qpe_ref[...]
    key_pe = kpe_ref[...]

    new_q, new_k = _block_body(queries, keys, query_pe, key_pe, w_ref, vec_ref)

    # Two full-ref stores (no partial sub-range stores).
    outq_ref[...] = new_q
    outk_ref[...] = new_k


def two_way_attention_block(queries, keys, query_pe, key_pe, wslab, vslab):
    """Jitted wrapper: nothing but (free) contiguous reshapes + the pallas_call."""
    B, nq, C = queries.shape
    nk = keys.shape[1]
    vmem = pl.BlockSpec(memory_space=pltpu.MemorySpace.VMEM)

    # NOTE(v7x): a grid=(B,) "parallel" split over the two TensorCores could be
    # evaluated; the folded single program minimizes fixed overhead on the
    # single-TC v5e/v6e and is kept here.
    out_q, out_k = pl.pallas_call(
        two_way_block_kernel,
        out_shape=(jax.ShapeDtypeStruct((B * nq, C), jnp.float32),
                   jax.ShapeDtypeStruct((B * nk, C), jnp.float32)),
        in_specs=[vmem, vmem, vmem, vmem, vmem, vmem],
        out_specs=(vmem, vmem),
    )(queries.reshape(B * nq, C), keys.reshape(B * nk, C),
      query_pe.reshape(B * nq, C), key_pe.reshape(B * nk, C),
      wslab, vslab)

    return out_q.reshape(B, nq, C), out_k.reshape(B, nk, C)


# -------------------------------- reference ------------------------------------
def _ref_attention(q_in, k_in, v_in, p, num_heads):
    qw, qb, kw, kb, vw, vb, ow, ob = p
    q = q_in @ qw + qb
    k = k_in @ kw + kb
    v = v_in @ vw + vb
    nq, D = q.shape
    nk = k.shape[0]
    d = D // num_heads
    qh = q.reshape(nq, num_heads, d).transpose(1, 0, 2)
    kh = k.reshape(nk, num_heads, d).transpose(1, 0, 2)
    vh = v.reshape(nk, num_heads, d).transpose(1, 0, 2)
    s = jnp.einsum("hqd,hkd->hqk", qh, kh) / math.sqrt(d)
    probs = jax.nn.softmax(s, axis=-1)
    o = jnp.einsum("hqk,hkd->hqd", probs, vh)
    o = o.transpose(1, 0, 2).reshape(nq, D)
    return o @ ow + ob


def _ref_layernorm(x, g, b):
    mu = jnp.mean(x, axis=-1, keepdims=True)
    var = jnp.mean((x - mu) ** 2, axis=-1, keepdims=True)
    return (x - mu) * jax.lax.rsqrt(var + EPS) * g + b


def reference_forward(queries, keys, query_pe, key_pe, params):
    sa, n1 = params[0:8], params[8:10]
    c_t2i, n2 = params[10:18], params[18:20]
    mlp, n3, n4 = params[20:24], params[24:26], params[26:28]
    c_i2t = params[28:36]

    def one(qs, ks, qpe, kpe):
        if SKIP_FIRST_LAYER_PE:
            qs = _ref_attention(qs, qs, qs, sa, NUM_HEADS)
        else:
            q = qs + qpe
            qs = qs + _ref_attention(q, q, qs, sa, NUM_HEADS)
        qs = _ref_layernorm(qs, n1[0], n1[1])

        q = qs + qpe
        k = ks + kpe
        qs = qs + _ref_attention(q, k, ks, c_t2i, NUM_HEADS)
        qs = _ref_layernorm(qs, n2[0], n2[1])

        h = jnp.maximum(qs @ mlp[0] + mlp[1], 0.0)
        qs = _ref_layernorm(qs + (h @ mlp[2] + mlp[3]), n3[0], n3[1])

        q = qs + qpe
        k = ks + kpe
        ks = ks + _ref_attention(k, q, qs, c_i2t, NUM_HEADS)
        ks = _ref_layernorm(ks, n4[0], n4[1])
        return qs, ks

    return jax.vmap(one)(queries, keys, query_pe, key_pe)


if __name__ == "__main__":
    key = jax.random.PRNGKey(0)
    k1, k2, k3, k4, kparam = jax.random.split(key, 5)
    queries = jax.random.normal(k1, (BATCH, NQ, EMBED_DIM), jnp.float32)
    keys = jax.random.normal(k2, (BATCH, NK, EMBED_DIM), jnp.float32)
    query_pe = jax.random.normal(k3, (BATCH, NQ, EMBED_DIM), jnp.float32)
    key_pe = jax.random.normal(k4, (BATCH, NK, EMBED_DIM), jnp.float32)
    params = make_params(kparam)

    # One-time host-side parameter packing (hoisted out of the per-call path).
    wslab, vslab = pack_params(params)

    fwd = jax.jit(two_way_attention_block)
    out_q, out_k = fwd(queries, keys, query_pe, key_pe, wslab, vslab)
    jax.block_until_ready((out_q, out_k))

    ref_q, ref_k = reference_forward(queries, keys, query_pe, key_pe, params)
    # Exact softmax normalization in-kernel; residual differences come only from
    # MXU matmul rounding, so the tolerance can be much tighter than before.
    assert jnp.allclose(out_q, ref_q, atol=1e-2, rtol=1e-2), "queries mismatch"
    assert jnp.allclose(out_k, ref_k, atol=1e-2, rtol=1e-2), "keys mismatch"

    print("KERNEL_OK")
</pallas_src>

<mosaic_0001>
module attributes {stable_mosaic.version = 11 : i64} {
  func.func @two_way_block_kernel(%arg0: memref<16x32xf32, #tpu.memory_space<vmem>>, %arg1: memref<32x32xf32, #tpu.memory_space<vmem>>, %arg2: memref<16x32xf32, #tpu.memory_space<vmem>>, %arg3: memref<32x32xf32, #tpu.memory_space<vmem>>, %arg4: memref<448x64xf32, #tpu.memory_space<vmem>>, %arg5: memref<24x64xf32, #tpu.memory_space<vmem>>, %arg6: memref<16x32xf32, #tpu.memory_space<vmem>>, %arg7: memref<32x32xf32, #tpu.memory_space<vmem>>) attributes {dimension_semantics = [], scalar_prefetch = 0 : i64, scratch_operands = 0 : i64, tpu.core_type = #tpu.core_type<tc>} {
    %c0 = arith.constant 0 : index
    %c0_0 = arith.constant 0 : index
    %0 = vector.load %arg0[%c0, %c0_0] : memref<16x32xf32, #tpu.memory_space<vmem>>, vector<16x32xf32>
    %c0_1 = arith.constant 0 : index
    %c0_2 = arith.constant 0 : index
    %1 = vector.load %arg1[%c0_1, %c0_2] : memref<32x32xf32, #tpu.memory_space<vmem>>, vector<32x32xf32>
    %c0_3 = arith.constant 0 : index
    %c0_4 = arith.constant 0 : index
    %2 = vector.load %arg2[%c0_3, %c0_4] : memref<16x32xf32, #tpu.memory_space<vmem>>, vector<16x32xf32>
    %c0_5 = arith.constant 0 : index
    %c0_6 = arith.constant 0 : index
    %3 = vector.load %arg3[%c0_5, %c0_6] : memref<32x32xf32, #tpu.memory_space<vmem>>, vector<32x32xf32>
    %4 = arith.addf %0, %2 : vector<16x32xf32>
    %c0_7 = arith.constant 0 : index
    %c0_8 = arith.constant 0 : index
    %5 = vector.load %arg4[%c0_7, %c0_8] : memref<448x64xf32, #tpu.memory_space<vmem>>, vector<32x32xf32>
    %c32 = arith.constant 32 : index
    %c0_9 = arith.constant 0 : index
    %6 = vector.load %arg4[%c32, %c0_9] : memref<448x64xf32, #tpu.memory_space<vmem>>, vector<64x64xf32>
    %c96 = arith.constant 96 : index
    %c0_10 = arith.constant 0 : index
    %7 = vector.load %arg4[%c96, %c0_10] : memref<448x64xf32, #tpu.memory_space<vmem>>, vector<32x32xf32>
    %c0_11 = arith.constant 0 : index
    %c0_12 = arith.constant 0 : index
    %8 = vector.load %arg5[%c0_11, %c0_12] : memref<24x64xf32, #tpu.memory_space<vmem>>, vector<1x32xf32>
    %c1 = arith.constant 1 : index
    %c0_13 = arith.constant 0 : index
    %9 = vector.load %arg5[%c1, %c0_13] : memref<24x64xf32, #tpu.memory_space<vmem>>, vector<1x64xf32>
    %c2 = arith.constant 2 : index
    %c0_14 = arith.constant 0 : index
    %10 = vector.load %arg5[%c2, %c0_14] : memref<24x64xf32, #tpu.memory_space<vmem>>, vector<1x32xf32>
    %cst = arith.constant dense<0.000000e+00> : vector<16x32xf32>
    %11 = tpu.matmul %4, %5, %cst {dimension_numbers = #tpu.dot_dimension_numbers<[1], [0], [0], [1], [0, 0, 1, 1], [], []>} : vector<16x32xf32>, vector<32x32xf32>, vector<16x32xf32> -> vector<16x32xf32>
    %12 = vector.broadcast %8 : vector<1x32xf32> to vector<16x32xf32>
    %13 = arith.addf %11, %12 : vector<16x32xf32>
    %14 = tpu.concatenate %4, %0 in 1 : vector<16x32xf32>, vector<16x32xf32> -> vector<16x64xf32>
    %cst_15 = arith.constant dense<0.000000e+00> : vector<16x64xf32>
    %15 = tpu.matmul %14, %6, %cst_15 {dimension_numbers = #tpu.dot_dimension_numbers<[1], [0], [0], [1], [0, 0, 1, 1], [], []>} : vector<16x64xf32>, vector<64x64xf32>, vector<16x64xf32> -> vector<16x64xf32>
    %16 = vector.broadcast %9 : vector<1x64xf32> to vector<16x64xf32>
    %17 = arith.addf %15, %16 : vector<16x64xf32>
    %18 = vector.extract_strided_slice %17 {offsets = [0, 0], sizes = [16, 32], strides = [1, 1]} : vector<16x64xf32> to vector<16x32xf32>
    %19 = vector.extract_strided_slice %17 {offsets = [0, 32], sizes = [16, 32], strides = [1, 1]} : vector<16x64xf32> to vector<16x32xf32>
    %20 = vector.extract_strided_slice %13 {offsets = [0, 0], sizes = [8, 32], strides = [1, 1]} : vector<16x32xf32> to vector<8x32xf32>
    %21 = vector.extract_strided_slice %18 {offsets = [0, 0], sizes = [8, 32], strides = [1, 1]} : vector<16x32xf32> to vector<8x32xf32>
    %22 = vector.extract_strided_slice %19 {offsets = [0, 0], sizes = [8, 32], strides = [1, 1]} : vector<16x32xf32> to vector<8x32xf32>
    %23 = vector.extract_strided_slice %20 {offsets = [0, 0], sizes = [8, 16], strides = [1, 1]} : vector<8x32xf32> to vector<8x16xf32>
    %24 = vector.extract_strided_slice %21 {offsets = [0, 0], sizes = [8, 16], strides = [1, 1]} : vector<8x32xf32> to vector<8x16xf32>
    %25 = vector.extract_strided_slice %22 {offsets = [0, 0], sizes = [8, 16], strides = [1, 1]} : vector<8x32xf32> to vector<8x16xf32>
    %cst_16 = arith.constant dense<0.000000e+00> : vector<8x8xf32>
    %26 = tpu.matmul %23, %24, %cst_16 {dimension_numbers = #tpu.dot_dimension_numbers<[1], [1], [0], [0], [0, 0, 1, 0], [], []>} : vector<8x16xf32>, vector<8x16xf32>, vector<8x8xf32> -> vector<8x8xf32>
    %cst_17 = arith.constant 2.500000e-01 : f32
    %27 = vector.broadcast %cst_17 : f32 to vector<8x8xf32>
    %28 = arith.mulf %26, %27 : vector<8x8xf32>
    %cst_18 = arith.constant dense<0xFF800000> : vector<8xf32>
    %29 = vector.multi_reduction <maximumf>, %28, %cst_18 [1] : vector<8x8xf32> to vector<8xf32>
    %30 = vector.shape_cast %29 : vector<8xf32> to vector<8x1xf32>
    %31 = vector.broadcast %30 : vector<8x1xf32> to vector<8x8xf32>
    %32 = arith.subf %28, %31 : vector<8x8xf32>
    %33 = math.exp %32 : vector<8x8xf32>
    %cst_19 = arith.constant dense<0.000000e+00> : vector<8xf32>
    %34 = vector.multi_reduction <add>, %33, %cst_19 [1] : vector<8x8xf32> to vector<8xf32>
    %35 = vector.shape_cast %34 : vector<8xf32> to vector<8x1xf32>
    %36 = vector.broadcast %35 : vector<8x1xf32> to vector<8x8xf32>
    %37 = arith.divf %33, %36 : vector<8x8xf32>
    %cst_20 = arith.constant dense<0.000000e+00> : vector<8x16xf32>
    %38 = tpu.matmul %37, %25, %cst_20 {dimension_numbers = #tpu.dot_dimension_numbers<[1], [0], [0], [1], [0, 0, 1, 1], [], []>} : vector<8x8xf32>, vector<8x16xf32>, vector<8x16xf32> -> vector<8x16xf32>
    %39 = vector.extract_strided_slice %20 {offsets = [0, 16], sizes = [8, 16], strides = [1, 1]} : vector<8x32xf32> to vector<8x16xf32>
    %40 = vector.extract_strided_slice %21 {offsets = [0, 16], sizes = [8, 16], strides = [1, 1]} : vector<8x32xf32> to vector<8x16xf32>
    %41 = vector.extract_strided_slice %22 {offsets = [0, 16], sizes = [8, 16], strides = [1, 1]} : vector<8x32xf32> to vector<8x16xf32>
    %cst_21 = arith.constant dense<0.000000e+00> : vector<8x8xf32>
    %42 = tpu.matmul %39, %40, %cst_21 {dimension_numbers = #tpu.dot_dimension_numbers<[1], [1], [0], [0], [0, 0, 1, 0], [], []>} : vector<8x16xf32>, vector<8x16xf32>, vector<8x8xf32> -> vector<8x8xf32>
    %cst_22 = arith.constant 2.500000e-01 : f32
    %43 = vector.broadcast %cst_22 : f32 to vector<8x8xf32>
    %44 = arith.mulf %42, %43 : vector<8x8xf32>
    %cst_23 = arith.constant dense<0xFF800000> : vector<8xf32>
    %45 = vector.multi_reduction <maximumf>, %44, %cst_23 [1] : vector<8x8xf32> to vector<8xf32>
    %46 = vector.shape_cast %45 : vector<8xf32> to vector<8x1xf32>
    %47 = vector.broadcast %46 : vector<8x1xf32> to vector<8x8xf32>
    %48 = arith.subf %44, %47 : vector<8x8xf32>
    %49 = math.exp %48 : vector<8x8xf32>
    %cst_24 = arith.constant dense<0.000000e+00> : vector<8xf32>
    %50 = vector.multi_reduction <add>, %49, %cst_24 [1] : vector<8x8xf32> to vector<8xf32>
    %51 = vector.shape_cast %50 : vector<8xf32> to vector<8x1xf32>
    %52 = vector.broadcast %51 : vector<8x1xf32> to vector<8x8xf32>
    %53 = arith.divf %49, %52 : vector<8x8xf32>
    %cst_25 = arith.constant dense<0.000000e+00> : vector<8x16xf32>
    %54 = tpu.matmul %53, %41, %cst_25 {dimension_numbers = #tpu.dot_dimension_numbers<[1], [0], [0], [1], [0, 0, 1, 1], [], []>} : vector<8x8xf32>, vector<8x16xf32>, vector<8x16xf32> -> vector<8x16xf32>
    %55 = tpu.concatenate %38, %54 in 1 : vector<8x16xf32>, vector<8x16xf32> -> vector<8x32xf32>
    %56 = vector.extract_strided_slice %13 {offsets = [8, 0], sizes = [8, 32], strides = [1, 1]} : vector<16x32xf32> to vector<8x32xf32>
    %57 = vector.extract_strided_slice %18 {offsets = [8, 0], sizes = [8, 32], strides = [1, 1]} : vector<16x32xf32> to vector<8x32xf32>
    %58 = vector.extract_strided_slice %19 {offsets = [8, 0], sizes = [8, 32], strides = [1, 1]} : vector<16x32xf32> to vector<8x32xf32>
    %59 = vector.extract_strided_slice %56 {offsets = [0, 0], sizes = [8, 16], strides = [1, 1]} : vector<8x32xf32> to vector<8x16xf32>
    %60 = vector.extract_strided_slice %57 {offsets = [0, 0], sizes = [8, 16], strides = [1, 1]} : vector<8x32xf32> to vector<8x16xf32>
    %61 = vector.extract_strided_slice %58 {offsets = [0, 0], sizes = [8, 16], strides = [1, 1]} : vector<8x32xf32> to vector<8x16xf32>
    %cst_26 = arith.constant dense<0.000000e+00> : vector<8x8xf32>
    %62 = tpu.matmul %59, %60, %cst_26 {dimension_numbers = #tpu.dot_dimension_numbers<[1], [1], [0], [0], [0, 0, 1, 0], [], []>} : vector<8x16xf32>, vector<8x16xf32>, vector<8x8xf32> -> vector<8x8xf32>
    %cst_27 = arith.constant 2.500000e-01 : f32
    %63 = vector.broadcast %cst_27 : f32 to vector<8x8xf32>
    %64 = arith.mulf %62, %63 : vector<8x8xf32>
    %cst_28 = arith.constant dense<0xFF800000> : vector<8xf32>
    %65 = vector.multi_reduction <maximumf>, %64, %cst_28 [1] : vector<8x8xf32> to vector<8xf32>
    %66 = vector.shape_cast %65 : vector<8xf32> to vector<8x1xf32>
    %67 = vector.broadcast %66 : vector<8x1xf32> to vector<8x8xf32>
    %68 = arith.subf %64, %67 : vector<8x8xf32>
    %69 = math.exp %68 : vector<8x8xf32>
    %cst_29 = arith.constant dense<0.000000e+00> : vector<8xf32>
    %70 = vector.multi_reduction <add>, %69, %cst_29 [1] : vector<8x8xf32> to vector<8xf32>
    %71 = vector.shape_cast %70 : vector<8xf32> to vector<8x1xf32>
    %72 = vector.broadcast %71 : vector<8x1xf32> to vector<8x8xf32>
    %73 = arith.divf %69, %72 : vector<8x8xf32>
    %cst_30 = arith.constant dense<0.000000e+00> : vector<8x16xf32>
    %74 = tpu.matmul %73, %61, %cst_30 {dimension_numbers = #tpu.dot_dimension_numbers<[1], [0], [0], [1], [0, 0, 1, 1], [], []>} : vector<8x8xf32>, vector<8x16xf32>, vector<8x16xf32> -> vector<8x16xf32>
    %75 = vector.extract_strided_slice %56 {offsets = [0, 16], sizes = [8, 16], strides = [1, 1]} : vector<8x32xf32> to vector<8x16xf32>
    %76 = vector.extract_strided_slice %57 {offsets = [0, 16], sizes = [8, 16], strides = [1, 1]} : vector<8x32xf32> to vector<8x16xf32>
    %77 = vector.extract_strided_slice %58 {offsets = [0, 16], sizes = [8, 16], strides = [1, 1]} : vector<8x32xf32> to vector<8x16xf32>
    %cst_31 = arith.constant dense<0.000000e+00> : vector<8x8xf32>
    %78 = tpu.matmul %75, %76, %cst_31 {dimension_numbers = #tpu.dot_dimension_numbers<[1], [1], [0], [0], [0, 0, 1, 0], [], []>} : vector<8x16xf32>, vector<8x16xf32>, vector<8x8xf32> -> vector<8x8xf32>
    %cst_32 = arith.constant 2.500000e-01 : f32
    %79 = vector.broadcast %cst_32 : f32 to vector<8x8xf32>
    %80 = arith.mulf %78, %79 : vector<8x8xf32>
    %cst_33 = arith.constant dense<0xFF800000> : vector<8xf32>
    %81 = vector.multi_reduction <maximumf>, %80, %cst_33 [1] : vector<8x8xf32> to vector<8xf32>
    %82 = vector.shape_cast %81 : vector<8xf32> to vector<8x1xf32>
    %83 = vector.broadcast %82 : vector<8x1xf32> to vector<8x8xf32>
    %84 = arith.subf %80, %83 : vector<8x8xf32>
    %85 = math.exp %84 : vector<8x8xf32>
    %cst_34 = arith.constant dense<0.000000e+00> : vector<8xf32>
    %86 = vector.multi_reduction <add>, %85, %cst_34 [1] : vector<8x8xf32> to vector<8xf32>
    %87 = vector.shape_cast %86 : vector<8xf32> to vector<8x1xf32>
    %88 = vector.broadcast %87 : vector<8x1xf32> to vector<8x8xf32>
    %89 = arith.divf %85, %88 : vector<8x8xf32>
    %cst_35 = arith.constant dense<0.000000e+00> : vector<8x16xf32>
    %90 = tpu.matmul %89, %77, %cst_35 {dimension_numbers = #tpu.dot_dimension_numbers<[1], [0], [0], [1], [0, 0, 1, 1], [], []>} : vector<8x8xf32>, vector<8x16xf32>, vector<8x16xf32> -> vector<8x16xf32>
    %91 = tpu.concatenate %74, %90 in 1 : vector<8x16xf32>, vector<8x16xf32> -> vector<8x32xf32>
    %92 = tpu.concatenate %55, %91 in 0 : vector<8x32xf32>, vector<8x32xf32> -> vector<16x32xf32>
    %cst_36 = arith.constant dense<0.000000e+00> : vector<16x32xf32>
    %93 = tpu.matmul %92, %7, %cst_36 {dimension_numbers = #tpu.dot_dimension_numbers<[1], [0], [0], [1], [0, 0, 1, 1], [], []>} : vector<16x32xf32>, vector<32x32xf32>, vector<16x32xf32> -> vector<16x32xf32>
    %94 = vector.broadcast %10 : vector<1x32xf32> to vector<16x32xf32>
    %95 = arith.addf %93, %94 : vector<16x32xf32>
    %96 = arith.addf %0, %95 : vector<16x32xf32>
    %c3 = arith.constant 3 : index
    %c0_37 = arith.constant 0 : index
    %97 = vector.load %arg5[%c3, %c0_37] : memref<24x64xf32, #tpu.memory_space<vmem>>, vector<1x32xf32>
    %c4 = arith.constant 4 : index
    %c0_38 = arith.constant 0 : index
    %98 = vector.load %arg5[%c4, %c0_38] : memref<24x64xf32, #tpu.memory_space<vmem>>, vector<1x32xf32>
    %cst_39 = arith.constant dense<0.000000e+00> : vector<16xf32>
    %99 = vector.multi_reduction <add>, %96, %cst_39 [1] : vector<16x32xf32> to vector<16xf32>
    %100 = vector.shape_cast %99 : vector<16xf32> to vector<16x1xf32>
    %cst_40 = arith.constant 3.200000e+01 : f32
    %101 = vector.broadcast %cst_40 : f32 to vector<16x1xf32>
    %102 = arith.divf %100, %101 : vector<16x1xf32>
    %103 = vector.broadcast %102 : vector<16x1xf32> to vector<16x32xf32>
    %104 = arith.subf %96, %103 : vector<16x32xf32>
    %105 = arith.mulf %104, %104 : vector<16x32xf32>
    %cst_41 = arith.constant dense<0.000000e+00> : vector<16xf32>
    %106 = vector.multi_reduction <add>, %105, %cst_41 [1] : vector<16x32xf32> to vector<16xf32>
    %107 = vector.shape_cast %106 : vector<16xf32> to vector<16x1xf32>
    %cst_42 = arith.constant 3.200000e+01 : f32
    %108 = vector.broadcast %cst_42 : f32 to vector<16x1xf32>
    %109 = arith.divf %107, %108 : vector<16x1xf32>
    %cst_43 = arith.constant 9.99999974E-6 : f32
    %110 = vector.broadcast %cst_43 : f32 to vector<16x1xf32>
    %111 = arith.addf %109, %110 : vector<16x1xf32>
    %112 = math.rsqrt %111 : vector<16x1xf32>
    %113 = vector.broadcast %112 : vector<16x1xf32> to vector<16x32xf32>
    %114 = arith.mulf %104, %113 : vector<16x32xf32>
    %115 = vector.broadcast %97 : vector<1x32xf32> to vector<16x32xf32>
    %116 = arith.mulf %114, %115 : vector<16x32xf32>
    %117 = vector.broadcast %98 : vector<1x32xf32> to vector<16x32xf32>
    %118 = arith.addf %116, %117 : vector<16x32xf32>
    %119 = arith.addf %118, %2 : vector<16x32xf32>
    %120 = arith.addf %1, %3 : vector<32x32xf32>
    %c128 = arith.constant 128 : index
    %c0_44 = arith.constant 0 : index
    %121 = vector.load %arg4[%c128, %c0_44] : memref<448x64xf32, #tpu.memory_space<vmem>>, vector<32x16xf32>
    %c160 = arith.constant 160 : index
    %c0_45 = arith.constant 0 : index
    %122 = vector.load %arg4[%c160, %c0_45] : memref<448x64xf32, #tpu.memory_space<vmem>>, vector<64x32xf32>
    %c224 = arith.constant 224 : index
    %c0_46 = arith.constant 0 : index
    %123 = vector.load %arg4[%c224, %c0_46] : memref<448x64xf32, #tpu.memory_space<vmem>>, vector<16x32xf32>
    %c5 = arith.constant 5 : index
    %c0_47 = arith.constant 0 : index
    %124 = vector.load %arg5[%c5, %c0_47] : memref<24x64xf32, #tpu.memory_space<vmem>>, vector<1x16xf32>
    %c6 = arith.constant 6 : index
    %c0_48 = arith.constant 0 : index
    %125 = vector.load %arg5[%c6, %c0_48] : memref<24x64xf32, #tpu.memory_space<vmem>>, vector<1x32xf32>
    %c7 = arith.constant 7 : index
    %c0_49 = arith.constant 0 : index
    %126 = vector.load %arg5[%c7, %c0_49] : memref<24x64xf32, #tpu.memory_space<vmem>>, vector<1x32xf32>
    %cst_50 = arith.constant dense<0.000000e+00> : vector<16x16xf32>
    %127 = tpu.matmul %119, %121, %cst_50 {dimension_numbers = #tpu.dot_dimension_numbers<[1], [0], [0], [1], [0, 0, 1, 1], [], []>} : vector<16x32xf32>, vector<32x16xf32>, vector<16x16xf32> -> vector<16x16xf32>
    %128 = vector.broadcast %124 : vector<1x16xf32> to vector<16x16xf32>
    %129 = arith.addf %127, %128 : vector<16x16xf32>
    %130 = tpu.concatenate %120, %1 in 1 : vector<32x32xf32>, vector<32x32xf32> -> vector<32x64xf32>
    %cst_51 = arith.constant dense<0.000000e+00> : vector<32x32xf32>
    %131 = tpu.matmul %130, %122, %cst_51 {dimension_numbers = #tpu.dot_dimension_numbers<[1], [0], [0], [1], [0, 0, 1, 1], [], []>} : vector<32x64xf32>, vector<64x32xf32>, vector<32x32xf32> -> vector<32x32xf32>
    %132 = vector.broadcast %125 : vector<1x32xf32> to vector<32x32xf32>
    %133 = arith.addf %131, %132 : vector<32x32xf32>
    %134 = vector.extract_strided_slice %133 {offsets = [0, 0], sizes = [32, 16], strides = [1, 1]} : vector<32x32xf32> to vector<32x16xf32>
    %135 = vector.extract_strided_slice %133 {offsets = [0, 16], sizes = [32, 16], strides = [1, 1]} : vector<32x32xf32> to vector<32x16xf32>
    %136 = vector.extract_strided_slice %129 {offsets = [0, 0], sizes = [8, 16], strides = [1, 1]} : vector<16x16xf32> to vector<8x16xf32>
    %137 = vector.extract_strided_slice %134 {offsets = [0, 0], sizes = [16, 16], strides = [1, 1]} : vector<32x16xf32> to vector<16x16xf32>
    %138 = vector.extract_strided_slice %135 {offsets = [0, 0], sizes = [16, 16], strides = [1, 1]} : vector<32x16xf32> to vector<16x16xf32>
    %139 = vector.extract_strided_slice %136 {offsets = [0, 0], sizes = [8, 8], strides = [1, 1]} : vector<8x16xf32> to vector<8x8xf32>
    %140 = vector.extract_strided_slice %137 {offsets = [0, 0], sizes = [16, 8], strides = [1, 1]} : vector<16x16xf32> to vector<16x8xf32>
    %141 = vector.extract_strided_slice %138 {offsets = [0, 0], sizes = [16, 8], strides = [1, 1]} : vector<16x16xf32> to vector<16x8xf32>
    %cst_52 = arith.constant dense<0.000000e+00> : vector<8x16xf32>
    %142 = tpu.matmul %139, %140, %cst_52 {dimension_numbers = #tpu.dot_dimension_numbers<[1], [1], [0], [0], [0, 0, 1, 0], [], []>} : vector<8x8xf32>, vector<16x8xf32>, vector<8x16xf32> -> vector<8x16xf32>
    %cst_53 = arith.constant 0.353553385 : f32
    %143 = vector.broadcast %cst_53 : f32 to vector<8x16xf32>
    %144 = arith.mulf %142, %143 : vector<8x16xf32>
    %cst_54 = arith.constant dense<0xFF800000> : vector<8xf32>
    %145 = vector.multi_reduction <maximumf>, %144, %cst_54 [1] : vector<8x16xf32> to vector<8xf32>
    %146 = vector.shape_cast %145 : vector<8xf32> to vector<8x1xf32>
    %147 = vector.broadcast %146 : vector<8x1xf32> to vector<8x16xf32>
    %148 = arith.subf %144, %147 : vector<8x16xf32>
    %149 = math.exp %148 : vector<8x16xf32>
    %cst_55 = arith.constant dense<0.000000e+00> : vector<8xf32>
    %150 = vector.multi_reduction <add>, %149, %cst_55 [1] : vector<8x16xf32> to vector<8xf32>
    %151 = vector.shape_cast %150 : vector<8xf32> to vector<8x1xf32>
    %152 = vector.broadcast %151 : vector<8x1xf32> to vector<8x16xf32>
    %153 = arith.divf %149, %152 : vector<8x16xf32>
    %cst_56 = arith.constant dense<0.000000e+00> : vector<8x8xf32>
    %154 = tpu.matmul %153, %141, %cst_56 {dimension_numbers = #tpu.dot_dimension_numbers<[1], [0], [0], [1], [0, 0, 1, 1], [], []>} : vector<8x16xf32>, vector<16x8xf32>, vector<8x8xf32> -> vector<8x8xf32>
    %155 = vector.extract_strided_slice %136 {offsets = [0, 8], sizes = [8, 8], strides = [1, 1]} : vector<8x16xf32> to vector<8x8xf32>
    %156 = vector.extract_strided_slice %137 {offsets = [0, 8], sizes = [16, 8], strides = [1, 1]} : vector<16x16xf32> to vector<16x8xf32>
    %157 = vector.extract_strided_slice %138 {offsets = [0, 8], sizes = [16, 8], strides = [1, 1]} : vector<16x16xf32> to vector<16x8xf32>
    %cst_57 = arith.constant dense<0.000000e+00> : vector<8x16xf32>
    %158 = tpu.matmul %155, %156, %cst_57 {dimension_numbers = #tpu.dot_dimension_numbers<[1], [1], [0], [0], [0, 0, 1, 0], [], []>} : vector<8x8xf32>, vector<16x8xf32>, vector<8x16xf32> -> vector<8x16xf32>
    %cst_58 = arith.constant 0.353553385 : f32
    %159 = vector.broadcast %cst_58 : f32 to vector<8x16xf32>
    %160 = arith.mulf %158, %159 : vector<8x16xf32>
    %cst_59 = arith.constant dense<0xFF800000> : vector<8xf32>
    %161 = vector.multi_reduction <maximumf>, %160, %cst_59 [1] : vector<8x16xf32> to vector<8xf32>
    %162 = vector.shape_cast %161 : vector<8xf32> to vector<8x1xf32>
    %163 = vector.broadcast %162 : vector<8x1xf32> to vector<8x16xf32>
    %164 = arith.subf %160, %163 : vector<8x16xf32>
    %165 = math.exp %164 : vector<8x16xf32>
    %cst_60 = arith.constant dense<0.000000e+00> : vector<8xf32>
    %166 = vector.multi_reduction <add>, %165, %cst_60 [1] : vector<8x16xf32> to vector<8xf32>
    %167 = vector.shape_cast %166 : vector<8xf32> to vector<8x1xf32>
    %168 = vector.broadcast %167 : vector<8x1xf32> to vector<8x16xf32>
    %169 = arith.divf %165, %168 : vector<8x16xf32>
    %cst_61 = arith.constant dense<0.000000e+00> : vector<8x8xf32>
    %170 = tpu.matmul %169, %157, %cst_61 {dimension_numbers = #tpu.dot_dimension_numbers<[1], [0], [0], [1], [0, 0, 1, 1], [], []>} : vector<8x16xf32>, vector<16x8xf32>, vector<8x8xf32> -> vector<8x8xf32>
    %171 = tpu.concatenate %154, %170 in 1 : vector<8x8xf32>, vector<8x8xf32> -> vector<8x16xf32>
    %172 = vector.extract_strided_slice %129 {offsets = [8, 0], sizes = [8, 16], strides = [1, 1]} : vector<16x16xf32> to vector<8x16xf32>
    %173 = vector.extract_strided_slice %134 {offsets = [16, 0], sizes = [16, 16], strides = [1, 1]} : vector<32x16xf32> to vector<16x16xf32>
    %174 = vector.extract_strided_slice %135 {offsets = [16, 0], sizes = [16, 16], strides = [1, 1]} : vector<32x16xf32> to vector<16x16xf32>
    %175 = vector.extract_strided_slice %172 {offsets = [0, 0], sizes = [8, 8], strides = [1, 1]} : vector<8x16xf32> to vector<8x8xf32>
    %176 = vector.extract_strided_slice %173 {offsets = [0, 0], sizes = [16, 8], strides = [1, 1]} : vector<16x16xf32> to vector<16x8xf32>
    %177 = vector.extract_strided_slice %174 {offsets = [0, 0], sizes = [16, 8], strides = [1, 1]} : vector<16x16xf32> to vector<16x8xf32>
    %cst_62 = arith.constant dense<0.000000e+00> : vector<8x16xf32>
    %178 = tpu.matmul %175, %176, %cst_62 {dimension_numbers = #tpu.dot_dimension_numbers<[1], [1], [0], [0], [0, 0, 1, 0], [], []>} : vector<8x8xf32>, vector<16x8xf32>, vector<8x16xf32> -> vector<8x16xf32>
    %cst_63 = arith.constant 0.353553385 : f32
    %179 = vector.broadcast %cst_63 : f32 to vector<8x16xf32>
    %180 = arith.mulf %178, %179 : vector<8x16xf32>
    %cst_64 = arith.constant dense<0xFF800000> : vector<8xf32>
    %181 = vector.multi_reduction <maximumf>, %180, %cst_64 [1] : vector<8x16xf32> to vector<8xf32>
    %182 = vector.shape_cast %181 : vector<8xf32> to vector<8x1xf32>
    %183 = vector.broadcast %182 : vector<8x1xf32> to vector<8x16xf32>
    %184 = arith.subf %180, %183 : vector<8x16xf32>
    %185 = math.exp %184 : vector<8x16xf32>
    %cst_65 = arith.constant dense<0.000000e+00> : vector<8xf32>
    %186 = vector.multi_reduction <add>, %185, %cst_65 [1] : vector<8x16xf32> to vector<8xf32>
    %187 = vector.shape_cast %186 : vector<8xf32> to vector<8x1xf32>
    %188 = vector.broadcast %187 : vector<8x1xf32> to vector<8x16xf32>
    %189 = arith.divf %185, %188 : vector<8x16xf32>
    %cst_66 = arith.constant dense<0.000000e+00> : vector<8x8xf32>
    %190 = tpu.matmul %189, %177, %cst_66 {dimension_numbers = #tpu.dot_dimension_numbers<[1], [0], [0], [1], [0, 0, 1, 1], [], []>} : vector<8x16xf32>, vector<16x8xf32>, vector<8x8xf32> -> vector<8x8xf32>
    %191 = vector.extract_strided_slice %172 {offsets = [0, 8], sizes = [8, 8], strides = [1, 1]} : vector<8x16xf32> to vector<8x8xf32>
    %192 = vector.extract_strided_slice %173 {offsets = [0, 8], sizes = [16, 8], strides = [1, 1]} : vector<16x16xf32> to vector<16x8xf32>
    %193 = vector.extract_strided_slice %174 {offsets = [0, 8], sizes = [16, 8], strides = [1, 1]} : vector<16x16xf32> to vector<16x8xf32>
    %cst_67 = arith.constant dense<0.000000e+00> : vector<8x16xf32>
    %194 = tpu.matmul %191, %192, %cst_67 {dimension_numbers = #tpu.dot_dimension_numbers<[1], [1], [0], [0], [0, 0, 1, 0], [], []>} : vector<8x8xf32>, vector<16x8xf32>, vector<8x16xf32> -> vector<8x16xf32>
    %cst_68 = arith.constant 0.353553385 : f32
    %195 = vector.broadcast %cst_68 : f32 to vector<8x16xf32>
    %196 = arith.mulf %194, %195 : vector<8x16xf32>
    %cst_69 = arith.constant dense<0xFF800000> : vector<8xf32>
    %197 = vector.multi_reduction <maximumf>, %196, %cst_69 [1] : vector<8x16xf32> to vector<8xf32>
    %198 = vector.shape_cast %197 : vector<8xf32> to vector<8x1xf32>
    %199 = vector.broadcast %198 : vector<8x1xf32> to vector<8x16xf32>
    %200 = arith.subf %196, %199 : vector<8x16xf32>
    %201 = math.exp %200 : vector<8x16xf32>
    %cst_70 = arith.constant dense<0.000000e+00> : vector<8xf32>
    %202 = vector.multi_reduction <add>, %201, %cst_70 [1] : vector<8x16xf32> to vector<8xf32>
    %203 = vector.shape_cast %202 : vector<8xf32> to vector<8x1xf32>
    %204 = vector.broadcast %203 : vector<8x1xf32> to vector<8x16xf32>
    %205 = arith.divf %201, %204 : vector<8x16xf32>
    %cst_71 = arith.constant dense<0.000000e+00> : vector<8x8xf32>
    %206 = tpu.matmul %205, %193, %cst_71 {dimension_numbers = #tpu.dot_dimension_numbers<[1], [0], [0], [1], [0, 0, 1, 1], [], []>} : vector<8x16xf32>, vector<16x8xf32>, vector<8x8xf32> -> vector<8x8xf32>
    %207 = tpu.concatenate %190, %206 in 1 : vector<8x8xf32>, vector<8x8xf32> -> vector<8x16xf32>
    %208 = tpu.concatenate %171, %207 in 0 : vector<8x16xf32>, vector<8x16xf32> -> vector<16x16xf32>
    %cst_72 = arith.constant dense<0.000000e+00> : vector<16x32xf32>
    %209 = tpu.matmul %208, %123, %cst_72 {dimension_numbers = #tpu.dot_dimension_numbers<[1], [0], [0], [1], [0, 0, 1, 1], [], []>} : vector<16x16xf32>, vector<16x32xf32>, vector<16x32xf32> -> vector<16x32xf32>
    %210 = vector.broadcast %126 : vector<1x32xf32> to vector<16x32xf32>
    %211 = arith.addf %209, %210 : vector<16x32xf32>
    %212 = arith.addf %118, %211 : vector<16x32xf32>
    %c8 = arith.constant 8 : index
    %c0_73 = arith.constant 0 : index
    %213 = vector.load %arg5[%c8, %c0_73] : memref<24x64xf32, #tpu.memory_space<vmem>>, vector<1x32xf32>
    %c9 = arith.constant 9 : index
    %c0_74 = arith.constant 0 : index
    %214 = vector.load %arg5[%c9, %c0_74] : memref<24x64xf32, #tpu.memory_space<vmem>>, vector<1x32xf32>
    %cst_75 = arith.constant dense<0.000000e+00> : vector<16xf32>
    %215 = vector.multi_reduction <add>, %212, %cst_75 [1] : vector<16x32xf32> to vector<16xf32>
    %216 = vector.shape_cast %215 : vector<16xf32> to vector<16x1xf32>
    %cst_76 = arith.constant 3.200000e+01 : f32
    %217 = vector.broadcast %cst_76 : f32 to vector<16x1xf32>
    %218 = arith.divf %216, %217 : vector<16x1xf32>
    %219 = vector.broadcast %218 : vector<16x1xf32> to vector<16x32xf32>
    %220 = arith.subf %212, %219 : vector<16x32xf32>
    %221 = arith.mulf %220, %220 : vector<16x32xf32>
    %cst_77 = arith.constant dense<0.000000e+00> : vector<16xf32>
    %222 = vector.multi_reduction <add>, %221, %cst_77 [1] : vector<16x32xf32> to vector<16xf32>
    %223 = vector.shape_cast %222 : vector<16xf32> to vector<16x1xf32>
    %cst_78 = arith.constant 3.200000e+01 : f32
    %224 = vector.broadcast %cst_78 : f32 to vector<16x1xf32>
    %225 = arith.divf %223, %224 : vector<16x1xf32>
    %cst_79 = arith.constant 9.99999974E-6 : f32
    %226 = vector.broadcast %cst_79 : f32 to vector<16x1xf32>
    %227 = arith.addf %225, %226 : vector<16x1xf32>
    %228 = math.rsqrt %227 : vector<16x1xf32>
    %229 = vector.broadcast %228 : vector<16x1xf32> to vector<16x32xf32>
    %230 = arith.mulf %220, %229 : vector<16x32xf32>
    %231 = vector.broadcast %213 : vector<1x32xf32> to vector<16x32xf32>
    %232 = arith.mulf %230, %231 : vector<16x32xf32>
    %233 = vector.broadcast %214 : vector<1x32xf32> to vector<16x32xf32>
    %234 = arith.addf %232, %233 : vector<16x32xf32>
    %c240 = arith.constant 240 : index
    %c0_80 = arith.constant 0 : index
    %235 = vector.load %arg4[%c240, %c0_80] : memref<448x64xf32, #tpu.memory_space<vmem>>, vector<32x64xf32>
    %cst_81 = arith.constant dense<0.000000e+00> : vector<16x64xf32>
    %236 = tpu.matmul %234, %235, %cst_81 {dimension_numbers = #tpu.dot_dimension_numbers<[1], [0], [0], [1], [0, 0, 1, 1], [], []>} : vector<16x32xf32>, vector<32x64xf32>, vector<16x64xf32> -> vector<16x64xf32>
    %c10 = arith.constant 10 : index
    %c0_82 = arith.constant 0 : index
    %237 = vector.load %arg5[%c10, %c0_82] : memref<24x64xf32, #tpu.memory_space<vmem>>, vector<1x64xf32>
    %238 = vector.broadcast %237 : vector<1x64xf32> to vector<16x64xf32>
    %239 = arith.addf %236, %238 : vector<16x64xf32>
    %cst_83 = arith.constant 0.000000e+00 : f32
    %240 = vector.broadcast %cst_83 : f32 to vector<16x64xf32>
    %241 = arith.maximumf %239, %240 : vector<16x64xf32>
    %c272 = arith.constant 272 : index
    %c0_84 = arith.constant 0 : index
    %242 = vector.load %arg4[%c272, %c0_84] : memref<448x64xf32, #tpu.memory_space<vmem>>, vector<64x32xf32>
    %cst_85 = arith.constant dense<0.000000e+00> : vector<16x32xf32>
    %243 = tpu.matmul %241, %242, %cst_85 {dimension_numbers = #tpu.dot_dimension_numbers<[1], [0], [0], [1], [0, 0, 1, 1], [], []>} : vector<16x64xf32>, vector<64x32xf32>, vector<16x32xf32> -> vector<16x32xf32>
    %c11 = arith.constant 11 : index
    %c0_86 = arith.constant 0 : index
    %244 = vector.load %arg5[%c11, %c0_86] : memref<24x64xf32, #tpu.memory_space<vmem>>, vector<1x32xf32>
    %245 = vector.broadcast %244 : vector<1x32xf32> to vector<16x32xf32>
    %246 = arith.addf %243, %245 : vector<16x32xf32>
    %247 = arith.addf %234, %246 : vector<16x32xf32>
    %c12 = arith.constant 12 : index
    %c0_87 = arith.constant 0 : index
    %248 = vector.load %arg5[%c12, %c0_87] : memref<24x64xf32, #tpu.memory_space<vmem>>, vector<1x32xf32>
    %c13 = arith.constant 13 : index
    %c0_88 = arith.constant 0 : index
    %249 = vector.load %arg5[%c13, %c0_88] : memref<24x64xf32, #tpu.memory_space<vmem>>, vector<1x32xf32>
    %cst_89 = arith.constant dense<0.000000e+00> : vector<16xf32>
    %250 = vector.multi_reduction <add>, %247, %cst_89 [1] : vector<16x32xf32> to vector<16xf32>
    %251 = vector.shape_cast %250 : vector<16xf32> to vector<16x1xf32>
    %cst_90 = arith.constant 3.200000e+01 : f32
    %252 = vector.broadcast %cst_90 : f32 to vector<16x1xf32>
    %253 = arith.divf %251, %252 : vector<16x1xf32>
    %254 = vector.broadcast %253 : vector<16x1xf32> to vector<16x32xf32>
    %255 = arith.subf %247, %254 : vector<16x32xf32>
    %256 = arith.mulf %255, %255 : vector<16x32xf32>
    %cst_91 = arith.constant dense<0.000000e+00> : vector<16xf32>
    %257 = vector.multi_reduction <add>, %256, %cst_91 [1] : vector<16x32xf32> to vector<16xf32>
    %258 = vector.shape_cast %257 : vector<16xf32> to vector<16x1xf32>
    %cst_92 = arith.constant 3.200000e+01 : f32
    %259 = vector.broadcast %cst_92 : f32 to vector<16x1xf32>
    %260 = arith.divf %258, %259 : vector<16x1xf32>
    %cst_93 = arith.constant 9.99999974E-6 : f32
    %261 = vector.broadcast %cst_93 : f32 to vector<16x1xf32>
    %262 = arith.addf %260, %261 : vector<16x1xf32>
    %263 = math.rsqrt %262 : vector<16x1xf32>
    %264 = vector.broadcast %263 : vector<16x1xf32> to vector<16x32xf32>
    %265 = arith.mulf %255, %264 : vector<16x32xf32>
    %266 = vector.broadcast %248 : vector<1x32xf32> to vector<16x32xf32>
    %267 = arith.mulf %265, %266 : vector<16x32xf32>
    %268 = vector.broadcast %249 : vector<1x32xf32> to vector<16x32xf32>
    %269 = arith.addf %267, %268 : vector<16x32xf32>
    %270 = arith.addf %269, %2 : vector<16x32xf32>
    %271 = arith.addf %1, %3 : vector<32x32xf32>
    %c336 = arith.constant 336 : index
    %c0_94 = arith.constant 0 : index
    %272 = vector.load %arg4[%c336, %c0_94] : memref<448x64xf32, #tpu.memory_space<vmem>>, vector<32x16xf32>
    %c368 = arith.constant 368 : index
    %c0_95 = arith.constant 0 : index
    %273 = vector.load %arg4[%c368, %c0_95] : memref<448x64xf32, #tpu.memory_space<vmem>>, vector<64x32xf32>
    %c432 = arith.constant 432 : index
    %c0_96 = arith.constant 0 : index
    %274 = vector.load %arg4[%c432, %c0_96] : memref<448x64xf32, #tpu.memory_space<vmem>>, vector<16x32xf32>
    %c16 = arith.constant 16 : index
    %c0_97 = arith.constant 0 : index
    %275 = vector.load %arg5[%c16, %c0_97] : memref<24x64xf32, #tpu.memory_space<vmem>>, vector<1x16xf32>
    %c17 = arith.constant 17 : index
    %c0_98 = arith.constant 0 : index
    %276 = vector.load %arg5[%c17, %c0_98] : memref<24x64xf32, #tpu.memory_space<vmem>>, vector<1x32xf32>
    %c18 = arith.constant 18 : index
    %c0_99 = arith.constant 0 : index
    %277 = vector.load %arg5[%c18, %c0_99] : memref<24x64xf32, #tpu.memory_space<vmem>>, vector<1x32xf32>
    %cst_100 = arith.constant dense<0.000000e+00> : vector<32x16xf32>
    %278 = tpu.matmul %271, %272, %cst_100 {dimension_numbers = #tpu.dot_dimension_numbers<[1], [0], [0], [1], [0, 0, 1, 1], [], []>} : vector<32x32xf32>, vector<32x16xf32>, vector<32x16xf32> -> vector<32x16xf32>
    %279 = vector.broadcast %275 : vector<1x16xf32> to vector<32x16xf32>
    %280 = arith.addf %278, %279 : vector<32x16xf32>
    %281 = tpu.concatenate %270, %269 in 1 : vector<16x32xf32>, vector<16x32xf32> -> vector<16x64xf32>
    %cst_101 = arith.constant dense<0.000000e+00> : vector<16x32xf32>
    %282 = tpu.matmul %281, %273, %cst_101 {dimension_numbers = #tpu.dot_dimension_numbers<[1], [0], [0], [1], [0, 0, 1, 1], [], []>} : vector<16x64xf32>, vector<64x32xf32>, vector<16x32xf32> -> vector<16x32xf32>
    %283 = vector.broadcast %276 : vector<1x32xf32> to vector<16x32xf32>
    %284 = arith.addf %282, %283 : vector<16x32xf32>
    %285 = vector.extract_strided_slice %284 {offsets = [0, 0], sizes = [16, 16], strides = [1, 1]} : vector<16x32xf32> to vector<16x16xf32>
    %286 = vector.extract_strided_slice %284 {offsets = [0, 16], sizes = [16, 16], strides = [1, 1]} : vector<16x32xf32> to vector<16x16xf32>
    %287 = vector.extract_strided_slice %280 {offsets = [0, 0], sizes = [16, 16], strides = [1, 1]} : vector<32x16xf32> to vector<16x16xf32>
    %288 = vector.extract_strided_slice %285 {offsets = [0, 0], sizes = [8, 16], strides = [1, 1]} : vector<16x16xf32> to vector<8x16xf32>
    %289 = vector.extract_strided_slice %286 {offsets = [0, 0], sizes = [8, 16], strides = [1, 1]} : vector<16x16xf32> to vector<8x16xf32>
    %290 = vector.extract_strided_slice %287 {offsets = [0, 0], sizes = [16, 8], strides = [1, 1]} : vector<16x16xf32> to vector<16x8xf32>
    %291 = vector.extract_strided_slice %288 {offsets = [0, 0], sizes = [8, 8], strides = [1, 1]} : vector<8x16xf32> to vector<8x8xf32>
    %292 = vector.extract_strided_slice %289 {offsets = [0, 0], sizes = [8, 8], strides = [1, 1]} : vector<8x16xf32> to vector<8x8xf32>
    %cst_102 = arith.constant dense<0.000000e+00> : vector<16x8xf32>
    %293 = tpu.matmul %290, %291, %cst_102 {dimension_numbers = #tpu.dot_dimension_numbers<[1], [1], [0], [0], [0, 0, 1, 0], [], []>} : vector<16x8xf32>, vector<8x8xf32>, vector<16x8xf32> -> vector<16x8xf32>
    %cst_103 = arith.constant 0.353553385 : f32
    %294 = vector.broadcast %cst_103 : f32 to vector<16x8xf32>
    %295 = arith.mulf %293, %294 : vector<16x8xf32>
    %cst_104 = arith.constant dense<0xFF800000> : vector<16xf32>
    %296 = vector.multi_reduction <maximumf>, %295, %cst_104 [1] : vector<16x8xf32> to vector<16xf32>
    %297 = vector.shape_cast %296 : vector<16xf32> to vector<16x1xf32>
    %298 = vector.broadcast %297 : vector<16x1xf32> to vector<16x8xf32>
    %299 = arith.subf %295, %298 : vector<16x8xf32>
    %300 = math.exp %299 : vector<16x8xf32>
    %cst_105 = arith.constant dense<0.000000e+00> : vector<16xf32>
    %301 = vector.multi_reduction <add>, %300, %cst_105 [1] : vector<16x8xf32> to vector<16xf32>
    %302 = vector.shape_cast %301 : vector<16xf32> to vector<16x1xf32>
    %303 = vector.broadcast %302 : vector<16x1xf32> to vector<16x8xf32>
    %304 = arith.divf %300, %303 : vector<16x8xf32>
    %cst_106 = arith.constant dense<0.000000e+00> : vector<16x8xf32>
    %305 = tpu.matmul %304, %292, %cst_106 {dimension_numbers = #tpu.dot_dimension_numbers<[1], [0], [0], [1], [0, 0, 1, 1], [], []>} : vector<16x8xf32>, vector<8x8xf32>, vector<16x8xf32> -> vector<16x8xf32>
    %306 = vector.extract_strided_slice %287 {offsets = [0, 8], sizes = [16, 8], strides = [1, 1]} : vector<16x16xf32> to vector<16x8xf32>
    %307 = vector.extract_strided_slice %288 {offsets = [0, 8], sizes = [8, 8], strides = [1, 1]} : vector<8x16xf32> to vector<8x8xf32>
    %308 = vector.extract_strided_slice %289 {offsets = [0, 8], sizes = [8, 8], strides = [1, 1]} : vector<8x16xf32> to vector<8x8xf32>
    %cst_107 = arith.constant dense<0.000000e+00> : vector<16x8xf32>
    %309 = tpu.matmul %306, %307, %cst_107 {dimension_numbers = #tpu.dot_dimension_numbers<[1], [1], [0], [0], [0, 0, 1, 0], [], []>} : vector<16x8xf32>, vector<8x8xf32>, vector<16x8xf32> -> vector<16x8xf32>
    %cst_108 = arith.constant 0.353553385 : f32
    %310 = vector.broadcast %cst_108 : f32 to vector<16x8xf32>
    %311 = arith.mulf %309, %310 : vector<16x8xf32>
    %cst_109 = arith.constant dense<0xFF800000> : vector<16xf32>
    %312 = vector.multi_reduction <maximumf>, %311, %cst_109 [1] : vector<16x8xf32> to vector<16xf32>
    %313 = vector.shape_cast %312 : vector<16xf32> to vector<16x1xf32>
    %314 = vector.broadcast %313 : vector<16x1xf32> to vector<16x8xf32>
    %315 = arith.subf %311, %314 : vector<16x8xf32>
    %316 = math.exp %315 : vector<16x8xf32>
    %cst_110 = arith.constant dense<0.000000e+00> : vector<16xf32>
    %317 = vector.multi_reduction <add>, %316, %cst_110 [1] : vector<16x8xf32> to vector<16xf32>
    %318 = vector.shape_cast %317 : vector<16xf32> to vector<16x1xf32>
    %319 = vector.broadcast %318 : vector<16x1xf32> to vector<16x8xf32>
    %320 = arith.divf %316, %319 : vector<16x8xf32>
    %cst_111 = arith.constant dense<0.000000e+00> : vector<16x8xf32>
    %321 = tpu.matmul %320, %308, %cst_111 {dimension_numbers = #tpu.dot_dimension_numbers<[1], [0], [0], [1], [0, 0, 1, 1], [], []>} : vector<16x8xf32>, vector<8x8xf32>, vector<16x8xf32> -> vector<16x8xf32>
    %322 = tpu.concatenate %305, %321 in 1 : vector<16x8xf32>, vector<16x8xf32> -> vector<16x16xf32>
    %323 = vector.extract_strided_slice %280 {offsets = [16, 0], sizes = [16, 16], strides = [1, 1]} : vector<32x16xf32> to vector<16x16xf32>
    %324 = vector.extract_strided_slice %285 {offsets = [8, 0], sizes = [8, 16], strides = [1, 1]} : vector<16x16xf32> to vector<8x16xf32>
    %325 = vector.extract_strided_slice %286 {offsets = [8, 0], sizes = [8, 16], strides = [1, 1]} : vector<16x16xf32> to vector<8x16xf32>
    %326 = vector.extract_strided_slice %323 {offsets = [0, 0], sizes = [16, 8], strides = [1, 1]} : vector<16x16xf32> to vector<16x8xf32>
    %327 = vector.extract_strided_slice %324 {offsets = [0, 0], sizes = [8, 8], strides = [1, 1]} : vector<8x16xf32> to vector<8x8xf32>
    %328 = vector.extract_strided_slice %325 {offsets = [0, 0], sizes = [8, 8], strides = [1, 1]} : vector<8x16xf32> to vector<8x8xf32>
    %cst_112 = arith.constant dense<0.000000e+00> : vector<16x8xf32>
    %329 = tpu.matmul %326, %327, %cst_112 {dimension_numbers = #tpu.dot_dimension_numbers<[1], [1], [0], [0], [0, 0, 1, 0], [], []>} : vector<16x8xf32>, vector<8x8xf32>, vector<16x8xf32> -> vector<16x8xf32>
    %cst_113 = arith.constant 0.353553385 : f32
    %330 = vector.broadcast %cst_113 : f32 to vector<16x8xf32>
    %331 = arith.mulf %329, %330 : vector<16x8xf32>
    %cst_114 = arith.constant dense<0xFF800000> : vector<16xf32>
    %332 = vector.multi_reduction <maximumf>, %331, %cst_114 [1] : vector<16x8xf32> to vector<16xf32>
    %333 = vector.shape_cast %332 : vector<16xf32> to vector<16x1xf32>
    %334 = vector.broadcast %333 : vector<16x1xf32> to vector<16x8xf32>
    %335 = arith.subf %331, %334 : vector<16x8xf32>
    %336 = math.exp %335 : vector<16x8xf32>
    %cst_115 = arith.constant dense<0.000000e+00> : vector<16xf32>
    %337 = vector.multi_reduction <add>, %336, %cst_115 [1] : vector<16x8xf32> to vector<16xf32>
    %338 = vector.shape_cast %337 : vector<16xf32> to vector<16x1xf32>
    %339 = vector.broadcast %338 : vector<16x1xf32> to vector<16x8xf32>
    %340 = arith.divf %336, %339 : vector<16x8xf32>
    %cst_116 = arith.constant dense<0.000000e+00> : vector<16x8xf32>
    %341 = tpu.matmul %340, %328, %cst_116 {dimension_numbers = #tpu.dot_dimension_numbers<[1], [0], [0], [1], [0, 0, 1, 1], [], []>} : vector<16x8xf32>, vector<8x8xf32>, vector<16x8xf32> -> vector<16x8xf32>
    %342 = vector.extract_strided_slice %323 {offsets = [0, 8], sizes = [16, 8], strides = [1, 1]} : vector<16x16xf32> to vector<16x8xf32>
    %343 = vector.extract_strided_slice %324 {offsets = [0, 8], sizes = [8, 8], strides = [1, 1]} : vector<8x16xf32> to vector<8x8xf32>
    %344 = vector.extract_strided_slice %325 {offsets = [0, 8], sizes = [8, 8], strides = [1, 1]} : vector<8x16xf32> to vector<8x8xf32>
    %cst_117 = arith.constant dense<0.000000e+00> : vector<16x8xf32>
    %345 = tpu.matmul %342, %343, %cst_117 {dimension_numbers = #tpu.dot_dimension_numbers<[1], [1], [0], [0], [0, 0, 1, 0], [], []>} : vector<16x8xf32>, vector<8x8xf32>, vector<16x8xf32> -> vector<16x8xf32>
    %cst_118 = arith.constant 0.353553385 : f32
    %346 = vector.broadcast %cst_118 : f32 to vector<16x8xf32>
    %347 = arith.mulf %345, %346 : vector<16x8xf32>
    %cst_119 = arith.constant dense<0xFF800000> : vector<16xf32>
    %348 = vector.multi_reduction <maximumf>, %347, %cst_119 [1] : vector<16x8xf32> to vector<16xf32>
    %349 = vector.shape_cast %348 : vector<16xf32> to vector<16x1xf32>
    %350 = vector.broadcast %349 : vector<16x1xf32> to vector<16x8xf32>
    %351 = arith.subf %347, %350 : vector<16x8xf32>
    %352 = math.exp %351 : vector<16x8xf32>
    %cst_120 = arith.constant dense<0.000000e+00> : vector<16xf32>
    %353 = vector.multi_reduction <add>, %352, %cst_120 [1] : vector<16x8xf32> to vector<16xf32>
    %354 = vector.shape_cast %353 : vector<16xf32> to vector<16x1xf32>
    %355 = vector.broadcast %354 : vector<16x1xf32> to vector<16x8xf32>
    %356 = arith.divf %352, %355 : vector<16x8xf32>
    %cst_121 = arith.constant dense<0.000000e+00> : vector<16x8xf32>
    %357 = tpu.matmul %356, %344, %cst_121 {dimension_numbers = #tpu.dot_dimension_numbers<[1], [0], [0], [1], [0, 0, 1, 1], [], []>} : vector<16x8xf32>, vector<8x8xf32>, vector<16x8xf32> -> vector<16x8xf32>
    %358 = tpu.concatenate %341, %357 in 1 : vector<16x8xf32>, vector<16x8xf32> -> vector<16x16xf32>
    %359 = tpu.concatenate %322, %358 in 0 : vector<16x16xf32>, vector<16x16xf32> -> vector<32x16xf32>
    %cst_122 = arith.constant dense<0.000000e+00> : vector<32x32xf32>
    %360 = tpu.matmul %359, %274, %cst_122 {dimension_numbers = #tpu.dot_dimension_numbers<[1], [0], [0], [1], [0, 0, 1, 1], [], []>} : vector<32x16xf32>, vector<16x32xf32>, vector<32x32xf32> -> vector<32x32xf32>
    %361 = vector.broadcast %277 : vector<1x32xf32> to vector<32x32xf32>
    %362 = arith.addf %360, %361 : vector<32x32xf32>
    %363 = arith.addf %1, %362 : vector<32x32xf32>
    %c14 = arith.constant 14 : index
    %c0_123 = arith.constant 0 : index
    %364 = vector.load %arg5[%c14, %c0_123] : memref<24x64xf32, #tpu.memory_space<vmem>>, vector<1x32xf32>
    %c15 = arith.constant 15 : index
    %c0_124 = arith.constant 0 : index
    %365 = vector.load %arg5[%c15, %c0_124] : memref<24x64xf32, #tpu.memory_space<vmem>>, vector<1x32xf32>
    %cst_125 = arith.constant dense<0.000000e+00> : vector<32xf32>
    %366 = vector.multi_reduction <add>, %363, %cst_125 [1] : vector<32x32xf32> to vector<32xf32>
    %367 = vector.shape_cast %366 : vector<32xf32> to vector<32x1xf32>
    %cst_126 = arith.constant 3.200000e+01 : f32
    %368 = vector.broadcast %cst_126 : f32 to vector<32x1xf32>
    %369 = arith.divf %367, %368 : vector<32x1xf32>
    %370 = vector.broadcast %369 : vector<32x1xf32> to vector<32x32xf32>
    %371 = arith.subf %363, %370 : vector<32x32xf32>
    %372 = arith.mulf %371, %371 : vector<32x32xf32>
    %cst_127 = arith.constant dense<0.000000e+00> : vector<32xf32>
    %373 = vector.multi_reduction <add>, %372, %cst_127 [1] : vector<32x32xf32> to vector<32xf32>
    %374 = vector.shape_cast %373 : vector<32xf32> to vector<32x1xf32>
    %cst_128 = arith.constant 3.200000e+01 : f32
    %375 = vector.broadcast %cst_128 : f32 to vector<32x1xf32>
    %376 = arith.divf %374, %375 : vector<32x1xf32>
    %cst_129 = arith.constant 9.99999974E-6 : f32
    %377 = vector.broadcast %cst_129 : f32 to vector<32x1xf32>
    %378 = arith.addf %376, %377 : vector<32x1xf32>
    %379 = math.rsqrt %378 : vector<32x1xf32>
    %380 = vector.broadcast %379 : vector<32x1xf32> to vector<32x32xf32>
    %381 = arith.mulf %371, %380 : vector<32x32xf32>
    %382 = vector.broadcast %364 : vector<1x32xf32> to vector<32x32xf32>
    %383 = arith.mulf %381, %382 : vector<32x32xf32>
    %384 = vector.broadcast %365 : vector<1x32xf32> to vector<32x32xf32>
    %385 = arith.addf %383, %384 : vector<32x32xf32>
    %c0_130 = arith.constant 0 : index
    %c0_131 = arith.constant 0 : index
    %386 = vector.load %arg6[%c0_130, %c0_131] : memref<16x32xf32, #tpu.memory_space<vmem>>, vector<16x32xf32>
    tpu.vector_store %arg6[%c0_130, %c0_131], %269 {strides = array<i32>} : memref<16x32xf32, #tpu.memory_space<vmem>>, vector<16x32xf32>,
    %c0_132 = arith.constant 0 : index
    %c0_133 = arith.constant 0 : index
    %387 = vector.load %arg7[%c0_132, %c0_133] : memref<32x32xf32, #tpu.memory_space<vmem>>, vector<32x32xf32>
    tpu.vector_store %arg7[%c0_132, %c0_133], %385 {strides = array<i32>} : memref<32x32xf32, #tpu.memory_space<vmem>>, vector<32x32xf32>,
    return
  }
}

</mosaic_0001>

<llo_original>
// kernel: two_way_attention_block.1
$region0: #{two_way_attention_block.1}
  #allocation0 [shape = 'u32[]', space=smem, size = 0x4, offset = 0x4, fixed_abs, tag = 'smem constant byte address 0x4 - core index']
  #allocation1 [shape = 'u32[72,128]{1,0:T(1,128)}', space=vmem, size = 0x9000, scoped, tag = 'internal scratch']
  %s0 = inlined_call_operand.vmem [shape: f32[16,32], index: 0, kind: input, shape index: {}]
  %s1 = inlined_call_operand.vmem [shape: f32[32,32], index: 1, kind: input, shape index: {}]
  %s2 = inlined_call_operand.vmem [shape: f32[16,32], index: 2, kind: input, shape index: {}]
  %s3 = inlined_call_operand.vmem [shape: f32[32,32], index: 3, kind: input, shape index: {}]
  %s4 = inlined_call_operand.vmem [shape: f32[448,64], index: 4, kind: input, shape index: {}]
  %s5 = inlined_call_operand.vmem [shape: f32[24,64], index: 5, kind: input, shape index: {}]
  %s6 = inlined_call_operand.hbm [shape: f32[16,32], index: 6, kind: output, shape index: {0}]
  %s7 = inlined_call_operand.hbm [shape: f32[32,32], index: 7, kind: output, shape index: {1}]
  %8 = xla_tuple %s6, %s7
  %s9 = sld [smem:[#allocation0]]
  $region42: #{two_way_attention_block.1} parent=0
    _
  %s11 = ssub.s32 1, %s9
  %s12 = scalar_select 0, %s11, %s9
  $region1: #{two_way_attention_block.1} parent=0
    #allocation2 [shape = 'u8[8192]{0}', space=vmem, size = 0x2000, scoped, tag = 'output window, operand 0, single buffered']
    #allocation3 [shape = 's32[1]{0}', space=sflag, size = 0x4, scoped, tag = 'scoped memory for two_way_attention_block.1']
    #allocation4 [shape = 'u8[16384]{0}', space=vmem, size = 0x4000, scoped, tag = 'output window, operand 1, single buffered']
    #allocation5 [shape = 's32[1]{0}', space=sflag, size = 0x4, scoped, tag = 'scoped memory for two_way_attention_block.1']
    %13 = vsyncpa [#allocation3], 0
    %14 = vsyncpa [#allocation5], 0
    // Predicated region
    $region2: #{two_way_attention_block.1} parent=1 // pred_check
      _
    $region3: #{two_way_attention_block.1} parent=1 // pred_check_branch
      %16 = sbr.rel (0) target = $region5
    $region4: #{two_way_attention_block.1} parent=1 // pred_region
      _
    $region5: #{two_way_attention_block.1} parent=1 // pred_fallthru
      _
    // Predicated region
    $region6: #{two_way_attention_block.1} parent=1 // pred_check
      _
    $region7: #{two_way_attention_block.1} parent=1 // pred_check_branch
      %18 = sbr.rel (0) target = $region9
    $region8: #{two_way_attention_block.1} parent=1 // pred_region
      _
    $region9: #{two_way_attention_block.1} parent=1 // pred_fallthru
      _
    // Predicated region
    $region10: #{two_way_attention_block.1} parent=1 // pred_check
      _
    $region11: #{two_way_attention_block.1} parent=1 // pred_check_branch
      %20 = sbr.rel (0) target = $region13
    $region12: #{two_way_attention_block.1} parent=1 // pred_region
      _
    $region13: #{two_way_attention_block.1} parent=1 // pred_fallthru
      _
    // Predicated region
    $region14: #{two_way_attention_block.1} parent=1 // pred_check
      _
    $region15: #{two_way_attention_block.1} parent=1 // pred_check_branch
      %22 = sbr.rel (0) target = $region17
    $region16: #{two_way_attention_block.1} parent=1 // pred_region
      _
    $region17: #{two_way_attention_block.1} parent=1 // pred_fallthru
      _
    // Predicated region
    $region18: #{two_way_attention_block.1} parent=1 // pred_check
      _
    $region19: #{two_way_attention_block.1} parent=1 // pred_check_branch
      %24 = sbr.rel (0) target = $region21
    $region20: #{two_way_attention_block.1} parent=1 // pred_region
      _
    $region21: #{two_way_attention_block.1} parent=1 // pred_fallthru
      _
    // Predicated region
    $region22: #{two_way_attention_block.1} parent=1 // pred_check
      _
    $region23: #{two_way_attention_block.1} parent=1 // pred_check_branch
      %26 = sbr.rel (0) target = $region25
    $region24: #{two_way_attention_block.1} parent=1 // pred_region
      _
    $region25: #{two_way_attention_block.1} parent=1 // pred_fallthru
      _
    %v27 = vld [vmem:[%s0] sm:$0xff]
    %v28 = vld [vmem:[%s0 + $0x8] sm:$0xff]
    %v29 = vld [vmem:[%s1] sm:$0xff]
    %v30 = vld [vmem:[%s1 + $0x8] sm:$0xff]
    %v31 = vld [vmem:[%s1 + $0x10] sm:$0xff]
    %v32 = vld [vmem:[%s1 + $0x18] sm:$0xff]
    %v33 = vld [vmem:[%s2] sm:$0xff]
    %v34 = vld [vmem:[%s2 + $0x8] sm:$0xff]
    %v35 = vld [vmem:[%s3] sm:$0xff]
    %v36 = vld [vmem:[%s3 + $0x8] sm:$0xff]
    %v37 = vld [vmem:[%s3 + $0x10] sm:$0xff]
    %v38 = vld [vmem:[%s3 + $0x18] sm:$0xff]
    %v39 = vadd.f32 %v27, %v33
    %v40 = vadd.f32 %v28, %v34
    %v41 = vld [vmem:[%s4] sm:$0xff]
    %v42 = vld [vmem:[%s4 + $0x8] sm:$0xff]
    %v43 = vld [vmem:[%s4 + $0x10] sm:$0xff]
    %v44 = vld [vmem:[%s4 + $0x18] sm:$0xff]
    %v45 = vld [vmem:[%s4 + $0x20] sm:$0xff]
    %v46 = vld [vmem:[%s4 + $0x28] sm:$0xff]
    %v47 = vld [vmem:[%s4 + $0x30] sm:$0xff]
    %v48 = vld [vmem:[%s4 + $0x38] sm:$0xff]
    %v49 = vld [vmem:[%s4 + $0x40] sm:$0xff]
    %v50 = vld [vmem:[%s4 + $0x48] sm:$0xff]
    %v51 = vld [vmem:[%s4 + $0x50] sm:$0xff]
    %v52 = vld [vmem:[%s4 + $0x58] sm:$0xff]
    %v53 = vld [vmem:[%s4 + $0x60] sm:$0xff]
    %v54 = vld [vmem:[%s4 + $0x68] sm:$0xff]
    %v55 = vld [vmem:[%s4 + $0x70] sm:$0xff]
    %v56 = vld [vmem:[%s4 + $0x78] sm:$0xff]
    %v57 = vld [vmem:[%s5] sm:$0x1]
    %v58 = vld [vmem:[%s5 + $0x1] sm:$0x1]
    %v59 = vld [vmem:[%s5 + $0x2] sm:$0x1]
    %v60 = vperm.slane %v57, 0
    %vm61 = vcmask 261120
    %v63 = vsel %vm61, %v39, 0
    %v66 = vsel %vm61, %v40, 0
    %68 = vmatpush.msra.mxu0 0.0
    %69 = vmatpush.msra.mxu0 0.0
    %70 = vmatpush.msra.mxu0 0.0
    %71 = vmatpush.msra.mxu0 0.0
    %72 = vmatpush.msra.mxu0 0.0
    %73 = vmatpush.msra.mxu0 0.0
    %74 = vmatpush.msra.mxu0 0.0
    %75 = vmatpush.msra.mxu0 0.0
    %76 = vmatpush.msra.mxu0 0.0
    %77 = vmatpush.msra.mxu0 0.0
    %78 = vmatpush.msra.mxu0 0.0
    %79 = vmatpush.msra.mxu0 0.0
    %80 = vmatpush.msra.mxu0 %v44
    %81 = vmatpush.msra.mxu0 %v43
    %82 = vmatpush.msra.mxu0 %v42
    %83 = vmatpush.msra.mxu0 %v41
    %84 = vmatmul.f32.gmra.mxu0 %v63
    %v85 = vpop.f32.mrf.mxu0
    %v86 = vadd.f32 %v60, %v85
    %87 = vmatmul.f32.gmra.mxu0 %v66
    %v88 = vpop.f32.mrf.mxu0
    %v89 = vadd.f32 %v60, %v88
    %90 = vdwg.mxu0
    %93 = vrot.lane.b32.xlu0 %v27, 32
    %v94 = vpop.permute.xlu0 %93
    %95 = vrot.lane.b32.xlu0 %v28, 32
    %v96 = vpop.permute.xlu0 %95
    %v99 = vsel %vm61, %v39, %v94
    %v100 = vsel %vm61, %v40, %v96
    %v101 = vperm.slane %v58, 0
    %vm102 = vcmask 523264
    %v104 = vsel %vm102, %v99, 0
    %v107 = vsel %vm102, %v100, 0
    %109 = vmatpush.msra.mxu0 0.0
    %110 = vmatpush.msra.mxu0 0.0
    %111 = vmatpush.msra.mxu0 0.0
    %112 = vmatpush.msra.mxu0 0.0
    %113 = vmatpush.msra.mxu0 0.0
    %114 = vmatpush.msra.mxu0 0.0
    %115 = vmatpush.msra.mxu0 0.0
    %116 = vmatpush.msra.mxu0 0.0
    %117 = vmatpush.msra.mxu0 %v52
    %118 = vmatpush.msra.mxu0 %v51
    %119 = vmatpush.msra.mxu0 %v50
    %120 = vmatpush.msra.mxu0 %v49
    %121 = vmatpush.msra.mxu0 %v48
    %122 = vmatpush.msra.mxu0 %v47
    %123 = vmatpush.msra.mxu0 %v46
    %124 = vmatpush.msra.mxu0 %v45
    %125 = vmatmul.f32.gmra.mxu0 %v104
    %v126 = vpop.f32.mrf.mxu0
    %v127 = vadd.f32 %v101, %v126
    %128 = vmatmul.f32.gmra.mxu0 %v107
    %v129 = vpop.f32.mrf.mxu0
    %v130 = vadd.f32 %v101, %v129
    %131 = vdwg.mxu0
    %vm132 = vcmask 130048
    %v134 = vsel %vm132, %v86, 0
    %v137 = vsel %vm132, %v127, 0
    %139 = vmatpush.xpose.msra.mxu0 0.0
    %140 = vmatpush.xpose.msra.mxu0 0.0
    %141 = vmatpush.xpose.msra.mxu0 0.0
    %142 = vmatpush.xpose.msra.mxu0 0.0
    %143 = vmatpush.xpose.msra.mxu0 0.0
    %144 = vmatpush.xpose.msra.mxu0 0.0
    %145 = vmatpush.xpose.msra.mxu0 0.0
    %146 = vmatpush.xpose.msra.mxu0 0.0
    %147 = vmatpush.xpose.msra.mxu0 0.0
    %148 = vmatpush.xpose.msra.mxu0 0.0
    %149 = vmatpush.xpose.msra.mxu0 0.0
    %150 = vmatpush.xpose.msra.mxu0 0.0
    %151 = vmatpush.xpose.msra.mxu0 0.0
    %152 = vmatpush.xpose.msra.mxu0 0.0
    %153 = vmatpush.xpose.msra.mxu0 0.0
    %154 = vmatpush.xpose.msra.mxu0 %v137
    %155 = vmatmul.f32.gmra.mxu0 %v134
    %v156 = vpop.f32.mrf.mxu0
    %v157 = vadd.f32 0.0, %v156
    %158 = vdwg.mxu0
    %v159 = vmul.f32 %v157, 0.25
    %vm160 = vcmask 64512
    %v161 = vsel %vm160, %v159, -inf
    %162 = vmax.xlane.f32.xlu0 %v161
    %v163 = vpop.xlane.xlu0 %162
    %v164 = vsub.f32 %v159, %v163
    %v165 = vmul.f32 %v164, 1.442695
    %v166 = vpow.pop %v165
    %v167 = vsel %vm160, %v166, 0.0
    %168 = vadd.xlane.f32.xlu0 %v167
    %v169 = vpop.xlane.xlu0 %168
    %v170 = vrcp.pop %v169
    %v171 = vmul.f32 %v169, %v170
    %v172 = vsub.f32 1.0, %v171
    %v173 = vmul.f32 %v170, %v172
    %v174 = vadd.f32 %v170, %v173
    %vm175 = vweird.f32 %v169
    %vm176 = vweird.f32 %v170
    %vm177 = vmor %vm175, %vm176
    %v178 = vsel %vm177, %v170, %v174
    %v179 = vand.u32 2147483647, %v169
    %vm180 = vcmp.eq.f32.partialorder %v179, 8.507059e+37
    %v181 = vand.u32 %v169, 2147483648
    %v182 = vor.u32 1.1754944e-38, %v181
    %v183 = vsel %vm180, %v182, %v178
    %v184 = vmul.f32 %v166, %v183
    %185 = vrot.lane.b32.xlu0 %v127, 96
    %v186 = vpop.permute.xlu0 %185
    %v189 = vsel %vm160, %v184, 0
    %191 = vmatpush.msra.mxu0 0.0
    %192 = vmatpush.msra.mxu0 0.0
    %193 = vmatpush.msra.mxu0 0.0
    %194 = vmatpush.msra.mxu0 0.0
    %195 = vmatpush.msra.mxu0 0.0
    %196 = vmatpush.msra.mxu0 0.0
    %197 = vmatpush.msra.mxu0 0.0
    %198 = vmatpush.msra.mxu0 0.0
    %199 = vmatpush.msra.mxu0 0.0
    %200 = vmatpush.msra.mxu0 0.0
    %201 = vmatpush.msra.mxu0 0.0
    %202 = vmatpush.msra.mxu0 0.0
    %203 = vmatpush.msra.mxu0 0.0
    %204 = vmatpush.msra.mxu0 0.0
    %205 = vmatpush.msra.mxu0 0.0
    %206 = vmatpush.msra.mxu0 %v186
    %207 = vmatmul.f32.gmra.mxu0 %v189
    %v208 = vpop.f32.mrf.mxu0
    %v209 = vadd.f32 0.0, %v208
    %210 = vdwg.mxu0
    %211 = vrot.lane.b32.xlu0 %v86, 112
    %v212 = vpop.permute.xlu0 %211
    %213 = vrot.lane.b32.xlu0 %v127, 112
    %v214 = vpop.permute.xlu0 %213
    %v215 = vsel %vm132, %v212, 0
    %v217 = vsel %vm132, %v214, 0
    %219 = vmatpush.xpose.msra.mxu0 0.0
    %220 = vmatpush.xpose.msra.mxu0 0.0
    %221 = vmatpush.xpose.msra.mxu0 0.0
    %222 = vmatpush.xpose.msra.mxu0 0.0
    %223 = vmatpush.xpose.msra.mxu0 0.0
    %224 = vmatpush.xpose.msra.mxu0 0.0
    %225 = vmatpush.xpose.msra.mxu0 0.0
    %226 = vmatpush.xpose.msra.mxu0 0.0
    %227 = vmatpush.xpose.msra.mxu0 0.0
    %228 = vmatpush.xpose.msra.mxu0 0.0
    %229 = vmatpush.xpose.msra.mxu0 0.0
    %230 = vmatpush.xpose.msra.mxu0 0.0
    %231 = vmatpush.xpose.msra.mxu0 0.0
    %232 = vmatpush.xpose.msra.mxu0 0.0
    %233 = vmatpush.xpose.msra.mxu0 0.0
    %234 = vmatpush.xpose.msra.mxu0 %v217
    %235 = vmatmul.f32.gmra.mxu0 %v215
    %v236 = vpop.f32.mrf.mxu0
    %v237 = vadd.f32 0.0, %v236
    %238 = vdwg.mxu0
    %v239 = vmul.f32 %v237, 0.25
    %v240 = vsel %vm160, %v239, -inf
    %241 = vmax.xlane.f32.xlu0 %v240
    %v242 = vpop.xlane.xlu0 %241
    %v243 = vsub.f32 %v239, %v242
    %v244 = vmul.f32 %v243, 1.442695
    %v245 = vpow.pop %v244
    %v246 = vsel %vm160, %v245, 0.0
    %247 = vadd.xlane.f32.xlu0 %v246
    %v248 = vpop.xlane.xlu0 %247
    %v249 = vrcp.pop %v248
    %v250 = vmul.f32 %v248, %v249
    %v251 = vsub.f32 1.0, %v250
    %v252 = vmul.f32 %v249, %v251
    %v253 = vadd.f32 %v249, %v252
    %vm254 = vweird.f32 %v248
    %vm255 = vweird.f32 %v249
    %vm256 = vmor %vm254, %vm255
    %v257 = vsel %vm256, %v249, %v253
    %v258 = vand.u32 2147483647, %v248
    %vm259 = vcmp.eq.f32.partialorder %v258, 8.507059e+37
    %v260 = vand.u32 %v248, 2147483648
    %v261 = vor.u32 1.1754944e-38, %v260
    %v262 = vsel %vm259, %v261, %v257
    %v263 = vmul.f32 %v245, %v262
    %264 = vrot.lane.b32.xlu0 %v127, 80
    %v265 = vpop.permute.xlu0 %264
    %v268 = vsel %vm160, %v263, 0
    %270 = vmatpush.msra.mxu0 0.0
    %271 = vmatpush.msra.mxu0 0.0
    %272 = vmatpush.msra.mxu0 0.0
    %273 = vmatpush.msra.mxu0 0.0
    %274 = vmatpush.msra.mxu0 0.0
    %275 = vmatpush.msra.mxu0 0.0
    %276 = vmatpush.msra.mxu0 0.0
    %277 = vmatpush.msra.mxu0 0.0
    %278 = vmatpush.msra.mxu0 0.0
    %279 = vmatpush.msra.mxu0 0.0
    %280 = vmatpush.msra.mxu0 0.0
    %281 = vmatpush.msra.mxu0 0.0
    %282 = vmatpush.msra.mxu0 0.0
    %283 = vmatpush.msra.mxu0 0.0
    %284 = vmatpush.msra.mxu0 0.0
    %285 = vmatpush.msra.mxu0 %v265
    %286 = vmatmul.f32.gmra.mxu0 %v268
    %v287 = vpop.f32.mrf.mxu0
    %v288 = vadd.f32 0.0, %v287
    %289 = vdwg.mxu0
    %291 = vrot.lane.b32.xlu0 %v288, 16
    %v292 = vpop.permute.xlu0 %291
    %v294 = vsel %vm132, %v209, %v292
    %v296 = vsel %vm132, %v89, 0
    %v299 = vsel %vm132, %v130, 0
    %301 = vmatpush.xpose.msra.mxu0 0.0
    %302 = vmatpush.xpose.msra.mxu0 0.0
    %303 = vmatpush.xpose.msra.mxu0 0.0
    %304 = vmatpush.xpose.msra.mxu0 0.0
    %305 = vmatpush.xpose.msra.mxu0 0.0
    %306 = vmatpush.xpose.msra.mxu0 0.0
    %307 = vmatpush.xpose.msra.mxu0 0.0
    %308 = vmatpush.xpose.msra.mxu0 0.0
    %309 = vmatpush.xpose.msra.mxu0 0.0
    %310 = vmatpush.xpose.msra.mxu0 0.0
    %311 = vmatpush.xpose.msra.mxu0 0.0
    %312 = vmatpush.xpose.msra.mxu0 0.0
    %313 = vmatpush.xpose.msra.mxu0 0.0
    %314 = vmatpush.xpose.msra.mxu0 0.0
    %315 = vmatpush.xpose.msra.mxu0 0.0
    %316 = vmatpush.xpose.msra.mxu0 %v299
    %317 = vmatmul.f32.gmra.mxu0 %v296
    %v318 = vpop.f32.mrf.mxu0
    %v319 = vadd.f32 0.0, %v318
    %320 = vdwg.mxu0
    %v321 = vmul.f32 %v319, 0.25
    %v322 = vsel %vm160, %v321, -inf
    %323 = vmax.xlane.f32.xlu0 %v322
    %v324 = vpop.xlane.xlu0 %323
    %v325 = vsub.f32 %v321, %v324
    %v326 = vmul.f32 %v325, 1.442695
    %v327 = vpow.pop %v326
    %v328 = vsel %vm160, %v327, 0.0
    %329 = vadd.xlane.f32.xlu0 %v328
    %v330 = vpop.xlane.xlu0 %329
    %v331 = vrcp.pop %v330
    %v332 = vmul.f32 %v330, %v331
    %v333 = vsub.f32 1.0, %v332
    %v334 = vmul.f32 %v331, %v333
    %v335 = vadd.f32 %v331, %v334
    %vm336 = vweird.f32 %v330
    %vm337 = vweird.f32 %v331
    %vm338 = vmor %vm336, %vm337
    %v339 = vsel %vm338, %v331, %v335
    %v340 = vand.u32 2147483647, %v330
    %vm341 = vcmp.eq.f32.partialorder %v340, 8.507059e+37
    %v342 = vand.u32 %v330, 2147483648
    %v343 = vor.u32 1.1754944e-38, %v342
    %v344 = vsel %vm341, %v343, %v339
    %v345 = vmul.f32 %v327, %v344
    %346 = vrot.lane.b32.xlu0 %v130, 96
    %v347 = vpop.permute.xlu0 %346
    %v350 = vsel %vm160, %v345, 0
    %352 = vmatpush.msra.mxu0 0.0
    %353 = vmatpush.msra.mxu0 0.0
    %354 = vmatpush.msra.mxu0 0.0
    %355 = vmatpush.msra.mxu0 0.0
    %356 = vmatpush.msra.mxu0 0.0
    %357 = vmatpush.msra.mxu0 0.0
    %358 = vmatpush.msra.mxu0 0.0
    %359 = vmatpush.msra.mxu0 0.0
    %360 = vmatpush.msra.mxu0 0.0
    %361 = vmatpush.msra.mxu0 0.0
    %362 = vmatpush.msra.mxu0 0.0
    %363 = vmatpush.msra.mxu0 0.0
    %364 = vmatpush.msra.mxu0 0.0
    %365 = vmatpush.msra.mxu0 0.0
    %366 = vmatpush.msra.mxu0 0.0
    %367 = vmatpush.msra.mxu0 %v347
    %368 = vmatmul.f32.gmra.mxu0 %v350
    %v369 = vpop.f32.mrf.mxu0
    %v370 = vadd.f32 0.0, %v369
    %371 = vdwg.mxu0
    %372 = vrot.lane.b32.xlu0 %v89, 112
    %v373 = vpop.permute.xlu0 %372
    %374 = vrot.lane.b32.xlu0 %v130, 112
    %v375 = vpop.permute.xlu0 %374
    %v376 = vsel %vm132, %v373, 0
    %v378 = vsel %vm132, %v375, 0
    %380 = vmatpush.xpose.msra.mxu0 0.0
    %381 = vmatpush.xpose.msra.mxu0 0.0
    %382 = vmatpush.xpose.msra.mxu0 0.0
    %383 = vmatpush.xpose.msra.mxu0 0.0
    %384 = vmatpush.xpose.msra.mxu0 0.0
    %385 = vmatpush.xpose.msra.mxu0 0.0
    %386 = vmatpush.xpose.msra.mxu0 0.0
    %387 = vmatpush.xpose.msra.mxu0 0.0
    %388 = vmatpush.xpose.msra.mxu0 0.0
    %389 = vmatpush.xpose.msra.mxu0 0.0
    %390 = vmatpush.xpose.msra.mxu0 0.0
    %391 = vmatpush.xpose.msra.mxu0 0.0
    %392 = vmatpush.xpose.msra.mxu0 0.0
    %393 = vmatpush.xpose.msra.mxu0 0.0
    %394 = vmatpush.xpose.msra.mxu0 0.0
    %395 = vmatpush.xpose.msra.mxu0 %v378
    %396 = vmatmul.f32.gmra.mxu0 %v376
    %v397 = vpop.f32.mrf.mxu0
    %v398 = vadd.f32 0.0, %v397
    %399 = vdwg.mxu0
    %v400 = vmul.f32 %v398, 0.25
    %v401 = vsel %vm160, %v400, -inf
    %402 = vmax.xlane.f32.xlu0 %v401
    %v403 = vpop.xlane.xlu0 %402
    %v404 = vsub.f32 %v400, %v403
    %v405 = vmul.f32 %v404, 1.442695
    %v406 = vpow.pop %v405
    %v407 = vsel %vm160, %v406, 0.0
    %408 = vadd.xlane.f32.xlu0 %v407
    %v409 = vpop.xlane.xlu0 %408
    %v410 = vrcp.pop %v409
    %v411 = vmul.f32 %v409, %v410
    %v412 = vsub.f32 1.0, %v411
    %v413 = vmul.f32 %v410, %v412
    %v414 = vadd.f32 %v410, %v413
    %vm415 = vweird.f32 %v409
    %vm416 = vweird.f32 %v410
    %vm417 = vmor %vm415, %vm416
    %v418 = vsel %vm417, %v410, %v414
    %v419 = vand.u32 2147483647, %v409
    %vm420 = vcmp.eq.f32.partialorder %v419, 8.507059e+37
    %v421 = vand.u32 %v409, 2147483648
    %v422 = vor.u32 1.1754944e-38, %v421
    %v423 = vsel %vm420, %v422, %v418
    %v424 = vmul.f32 %v406, %v423
    %425 = vrot.lane.b32.xlu0 %v130, 80
    %v426 = vpop.permute.xlu0 %425
    %v429 = vsel %vm160, %v424, 0
    %431 = vmatpush.msra.mxu0 0.0
    %432 = vmatpush.msra.mxu0 0.0
    %433 = vmatpush.msra.mxu0 0.0
    %434 = vmatpush.msra.mxu0 0.0
    %435 = vmatpush.msra.mxu0 0.0
    %436 = vmatpush.msra.mxu0 0.0
    %437 = vmatpush.msra.mxu0 0.0
    %438 = vmatpush.msra.mxu0 0.0
    %439 = vmatpush.msra.mxu0 0.0
    %440 = vmatpush.msra.mxu0 0.0
    %441 = vmatpush.msra.mxu0 0.0
    %442 = vmatpush.msra.mxu0 0.0
    %443 = vmatpush.msra.mxu0 0.0
    %444 = vmatpush.msra.mxu0 0.0
    %445 = vmatpush.msra.mxu0 0.0
    %446 = vmatpush.msra.mxu0 %v426
    %447 = vmatmul.f32.gmra.mxu0 %v429
    %v448 = vpop.f32.mrf.mxu0
    %v449 = vadd.f32 0.0, %v448
    %450 = vdwg.mxu0
    %452 = vrot.lane.b32.xlu0 %v449, 16
    %v453 = vpop.permute.xlu0 %452
    %v455 = vsel %vm132, %v370, %v453
    %v456 = vperm.slane %v59, 0
    %v458 = vsel %vm61, %v294, 0
    %v461 = vsel %vm61, %v455, 0
    %463 = vmatpush.msra.mxu0 0.0
    %464 = vmatpush.msra.mxu0 0.0
    %465 = vmatpush.msra.mxu0 0.0
    %466 = vmatpush.msra.mxu0 0.0
    %467 = vmatpush.msra.mxu0 0.0
    %468 = vmatpush.msra.mxu0 0.0
    %469 = vmatpush.msra.mxu0 0.0
    %470 = vmatpush.msra.mxu0 0.0
    %471 = vmatpush.msra.mxu0 0.0
    %472 = vmatpush.msra.mxu0 0.0
    %473 = vmatpush.msra.mxu0 0.0
    %474 = vmatpush.msra.mxu0 0.0
    %475 = vmatpush.msra.mxu0 %v56
    %476 = vmatpush.msra.mxu0 %v55
    %477 = vmatpush.msra.mxu0 %v54
    %478 = vmatpush.msra.mxu0 %v53
    %479 = vmatmul.f32.gmra.mxu0 %v458
    %v480 = vpop.f32.mrf.mxu0
    %v481 = vadd.f32 %v456, %v480
    %482 = vmatmul.f32.gmra.mxu0 %v461
    %v483 = vpop.f32.mrf.mxu0
    %v484 = vadd.f32 %v456, %v483
    %485 = vdwg.mxu0
    %v486 = vadd.f32 %v27, %v481
    %v487 = vadd.f32 %v28, %v484
    %v488 = vld [vmem:[%s5 + $0x3] sm:$0x1]
    %v489 = vld [vmem:[%s5 + $0x4] sm:$0x1]
    %v490 = vsel %vm61, %v486, 0.0
    %491 = vadd.xlane.f32.xlu0 %v490
    %v492 = vpop.xlane.xlu0 %491
    %v493 = vsel %vm61, %v487, 0.0
    %494 = vadd.xlane.f32.xlu0 %v493
    %v495 = vpop.xlane.xlu0 %494
    %v496 = vrcp.pop 32.0
    %v497 = vmul.f32 32.0, %v496
    %v498 = vsub.f32 1.0, %v497
    %v499 = vmul.f32 %v496, %v498
    %v500 = vadd.f32 %v496, %v499
    %vm501 = vweird.f32 %v496
    %v502 = vsel %vm501, %v496, %v500
    %v503 = vmul.f32 %v492, %v502
    %v504 = vmul.f32 %v495, %v502
    %v505 = vsub.f32 %v486, %v503
    %v506 = vsub.f32 %v487, %v504
    %v507 = vmul.f32 %v505, %v505
    %v508 = vmul.f32 %v506, %v506
    %v509 = vsel %vm61, %v507, 0.0
    %510 = vadd.xlane.f32.xlu0 %v509
    %v511 = vpop.xlane.xlu0 %510
    %v512 = vsel %vm61, %v508, 0.0
    %513 = vadd.xlane.f32.xlu0 %v512
    %v514 = vpop.xlane.xlu0 %513
    %v515 = vmul.f32 %v511, %v502
    %v516 = vmul.f32 %v514, %v502
    %v517 = vadd.f32 %v515, 1e-05
    %v518 = vadd.f32 %v516, 1e-05
    %v519 = vrsqrt.pop %v517
    %v520 = vmul.f32 %v519, %v517
    %v521 = vmul.f32 %v520, %v519
    %v522 = vmul.f32 0.5, %v521
    %v523 = vsub.f32 1.5, %v522
    %v524 = vmul.f32 %v519, %v523
    %vm525 = vweird.f32 %v517
    %vm526 = vweird.f32 %v519
    %vm527 = vmor %vm525, %vm526
    %v528 = vsel %vm527, %v519, %v524
    %v529 = vrsqrt.pop %v518
    %v530 = vmul.f32 %v529, %v518
    %v531 = vmul.f32 %v530, %v529
    %v532 = vmul.f32 0.5, %v531
    %v533 = vsub.f32 1.5, %v532
    %v534 = vmul.f32 %v529, %v533
    %vm535 = vweird.f32 %v518
    %vm536 = vweird.f32 %v529
    %vm537 = vmor %vm535, %vm536
    %v538 = vsel %vm537, %v529, %v534
    %v539 = vmul.f32 %v505, %v528
    %v540 = vmul.f32 %v506, %v538
    %v541 = vperm.slane %v488, 0
    %v542 = vmul.f32 %v539, %v541
    %v543 = vmul.f32 %v540, %v541
    %v544 = vperm.slane %v489, 0
    %v545 = vadd.f32 %v542, %v544
    %v546 = vadd.f32 %v543, %v544
    %v547 = vadd.f32 %v545, %v33
    %v548 = vadd.f32 %v546, %v34
    %v549 = vadd.f32 %v29, %v35
    %v550 = vadd.f32 %v30, %v36
    %v551 = vadd.f32 %v31, %v37
    %v552 = vadd.f32 %v32, %v38
    %v553 = vld [vmem:[%s4 + $0x80] sm:$0xff]
    %v554 = vld [vmem:[%s4 + $0x88] sm:$0xff]
    %v555 = vld [vmem:[%s4 + $0x90] sm:$0xff]
    %v556 = vld [vmem:[%s4 + $0x98] sm:$0xff]
    %v557 = vld [vmem:[%s4 + $0xa0] sm:$0xff]
    %v558 = vld [vmem:[%s4 + $0xa8] sm:$0xff]
    %v559 = vld [vmem:[%s4 + $0xb0] sm:$0xff]
    %v560 = vld [vmem:[%s4 + $0xb8] sm:$0xff]
    %v561 = vld [vmem:[%s4 + $0xc0] sm:$0xff]
    %v562 = vld [vmem:[%s4 + $0xc8] sm:$0xff]
    %v563 = vld [vmem:[%s4 + $0xd0] sm:$0xff]
    %v564 = vld [vmem:[%s4 + $0xd8] sm:$0xff]
    %v565 = vld [vmem:[%s4 + $0xe0] sm:$0xff]
    %v566 = vld [vmem:[%s4 + $0xe8] sm:$0xff]
    %v567 = vld [vmem:[%s5 + $0x5] sm:$0x1]
    %v568 = vld [vmem:[%s5 + $0x6] sm:$0x1]
    %v569 = vld [vmem:[%s5 + $0x7] sm:$0x1]
    %v570 = vperm.slane %v567, 0
    %v572 = vsel %vm61, %v547, 0
    %v575 = vsel %vm61, %v548, 0
    %577 = vmatpush.msra.mxu0 0.0
    %578 = vmatpush.msra.mxu0 0.0
    %579 = vmatpush.msra.mxu0 0.0
    %580 = vmatpush.msra.mxu0 0.0
    %581 = vmatpush.msra.mxu0 0.0
    %582 = vmatpush.msra.mxu0 0.0
    %583 = vmatpush.msra.mxu0 0.0
    %584 = vmatpush.msra.mxu0 0.0
    %585 = vmatpush.msra.mxu0 0.0
    %586 = vmatpush.msra.mxu0 0.0
    %587 = vmatpush.msra.mxu0 0.0
    %588 = vmatpush.msra.mxu0 0.0
    %589 = vmatpush.msra.mxu0 %v556
    %590 = vmatpush.msra.mxu0 %v555
    %591 = vmatpush.msra.mxu0 %v554
    %592 = vmatpush.msra.mxu0 %v553
    %593 = vmatmul.f32.gmra.mxu0 %v572
    %v594 = vpop.f32.mrf.mxu0
    %v595 = vadd.f32 %v570, %v594
    %596 = vmatmul.f32.gmra.mxu0 %v575
    %v597 = vpop.f32.mrf.mxu0
    %v598 = vadd.f32 %v570, %v597
    %599 = vdwg.mxu0
    %604 = vrot.lane.b32.xlu0 %v29, 32
    %v605 = vpop.permute.xlu0 %604
    %606 = vrot.lane.b32.xlu0 %v30, 32
    %v607 = vpop.permute.xlu0 %606
    %608 = vrot.lane.b32.xlu0 %v31, 32
    %v609 = vpop.permute.xlu0 %608
    %610 = vrot.lane.b32.xlu0 %v32, 32
    %v611 = vpop.permute.xlu0 %610
    %v616 = vsel %vm61, %v549, %v605
    %v617 = vsel %vm61, %v550, %v607
    %v618 = vsel %vm61, %v551, %v609
    %v619 = vsel %vm61, %v552, %v611
    %v620 = vperm.slane %v568, 0
    %v622 = vsel %vm102, %v616, 0
    %v625 = vsel %vm102, %v617, 0
    %v628 = vsel %vm102, %v618, 0
    %v631 = vsel %vm102, %v619, 0
    %633 = vmatpush.msra.mxu0 0.0
    %634 = vmatpush.msra.mxu0 0.0
    %635 = vmatpush.msra.mxu0 0.0
    %636 = vmatpush.msra.mxu0 0.0
    %637 = vmatpush.msra.mxu0 0.0
    %638 = vmatpush.msra.mxu0 0.0
    %639 = vmatpush.msra.mxu0 0.0
    %640 = vmatpush.msra.mxu0 0.0
    %641 = vmatpush.msra.mxu0 %v564
    %642 = vmatpush.msra.mxu0 %v563
    %643 = vmatpush.msra.mxu0 %v562
    %644 = vmatpush.msra.mxu0 %v561
    %645 = vmatpush.msra.mxu0 %v560
    %646 = vmatpush.msra.mxu0 %v559
    %647 = vmatpush.msra.mxu0 %v558
    %648 = vmatpush.msra.mxu0 %v557
    %649 = vmatmul.f32.gmra.mxu0 %v622
    %v650 = vpop.f32.mrf.mxu0
    %v651 = vadd.f32 %v620, %v650
    %652 = vmatmul.f32.gmra.mxu0 %v625
    %v653 = vpop.f32.mrf.mxu0
    %v654 = vadd.f32 %v620, %v653
    %655 = vmatmul.f32.gmra.mxu0 %v628
    %v656 = vpop.f32.mrf.mxu0
    %v657 = vadd.f32 %v620, %v656
    %658 = vmatmul.f32.gmra.mxu0 %v631
    %v659 = vpop.f32.mrf.mxu0
    %v660 = vadd.f32 %v620, %v659
    %661 = vdwg.mxu0
    %v663 = vsel %vm160, %v595, 0
    %v666 = vsel %vm160, %v651, 0
    %v669 = vsel %vm160, %v654, 0
    %671 = vmatpush.xpose.msra.mxu0 0.0
    %672 = vmatpush.xpose.msra.mxu0 0.0
    %673 = vmatpush.xpose.msra.mxu0 0.0
    %674 = vmatpush.xpose.msra.mxu0 0.0
    %675 = vmatpush.xpose.msra.mxu0 0.0
    %676 = vmatpush.xpose.msra.mxu0 0.0
    %677 = vmatpush.xpose.msra.mxu0 0.0
    %678 = vmatpush.xpose.msra.mxu0 0.0
    %679 = vmatpush.xpose.msra.mxu0 0.0
    %680 = vmatpush.xpose.msra.mxu0 0.0
    %681 = vmatpush.xpose.msra.mxu0 0.0
    %682 = vmatpush.xpose.msra.mxu0 0.0
    %683 = vmatpush.xpose.msra.mxu0 0.0
    %684 = vmatpush.xpose.msra.mxu0 0.0
    %685 = vmatpush.xpose.msra.mxu0 %v669
    %686 = vmatpush.xpose.msra.mxu0 %v666
    %687 = vmatmul.f32.gmra.mxu0 %v663
    %v688 = vpop.f32.mrf.mxu0
    %v689 = vadd.f32 0.0, %v688
    %690 = vdwg.mxu0
    %v691 = vmul.f32 %v689, 0.35355338
    %v692 = vsel %vm132, %v691, -inf
    %693 = vmax.xlane.f32.xlu0 %v692
    %v694 = vpop.xlane.xlu0 %693
    %v695 = vsub.f32 %v691, %v694
    %v696 = vmul.f32 %v695, 1.442695
    %v697 = vpow.pop %v696
    %v698 = vsel %vm132, %v697, 0.0
    %699 = vadd.xlane.f32.xlu0 %v698
    %v700 = vpop.xlane.xlu0 %699
    %v701 = vrcp.pop %v700
    %v702 = vmul.f32 %v700, %v701
    %v703 = vsub.f32 1.0, %v702
    %v704 = vmul.f32 %v701, %v703
    %v705 = vadd.f32 %v701, %v704
    %vm706 = vweird.f32 %v700
    %vm707 = vweird.f32 %v701
    %vm708 = vmor %vm706, %vm707
    %v709 = vsel %vm708, %v701, %v705
    %v710 = vand.u32 2147483647, %v700
    %vm711 = vcmp.eq.f32.partialorder %v710, 8.507059e+37
    %v712 = vand.u32 %v700, 2147483648
    %v713 = vor.u32 1.1754944e-38, %v712
    %v714 = vsel %vm711, %v713, %v709
    %v715 = vmul.f32 %v697, %v714
    %716 = vrot.lane.b32.xlu0 %v651, 112
    %v717 = vpop.permute.xlu0 %716
    %718 = vrot.lane.b32.xlu0 %v654, 112
    %v719 = vpop.permute.xlu0 %718
    %v723 = vsel %vm132, %v715, 0
    %725 = vmatpush.msra.mxu0 0.0
    %726 = vmatpush.msra.mxu0 0.0
    %727 = vmatpush.msra.mxu0 0.0
    %728 = vmatpush.msra.mxu0 0.0
    %729 = vmatpush.msra.mxu0 0.0
    %730 = vmatpush.msra.mxu0 0.0
    %731 = vmatpush.msra.mxu0 0.0
    %732 = vmatpush.msra.mxu0 0.0
    %733 = vmatpush.msra.mxu0 0.0
    %734 = vmatpush.msra.mxu0 0.0
    %735 = vmatpush.msra.mxu0 0.0
    %736 = vmatpush.msra.mxu0 0.0
    %737 = vmatpush.msra.mxu0 0.0
    %738 = vmatpush.msra.mxu0 0.0
    %739 = vmatpush.msra.mxu0 %v719
    %740 = vmatpush.msra.mxu0 %v717
    %741 = vmatmul.f32.gmra.mxu0 %v723
    %v742 = vpop.f32.mrf.mxu0
    %v743 = vadd.f32 0.0, %v742
    %744 = vdwg.mxu0
    %745 = vrot.lane.b32.xlu0 %v595, 120
    %v746 = vpop.permute.xlu0 %745
    %747 = vrot.lane.b32.xlu0 %v651, 120
    %v748 = vpop.permute.xlu0 %747
    %749 = vrot.lane.b32.xlu0 %v654, 120
    %v750 = vpop.permute.xlu0 %749
    %v751 = vsel %vm160, %v746, 0
    %v753 = vsel %vm160, %v748, 0
    %v755 = vsel %vm160, %v750, 0
    %757 = vmatpush.xpose.msra.mxu0 0.0
    %758 = vmatpush.xpose.msra.mxu0 0.0
    %759 = vmatpush.xpose.msra.mxu0 0.0
    %760 = vmatpush.xpose.msra.mxu0 0.0
    %761 = vmatpush.xpose.msra.mxu0 0.0
    %762 = vmatpush.xpose.msra.mxu0 0.0
    %763 = vmatpush.xpose.msra.mxu0 0.0
    %764 = vmatpush.xpose.msra.mxu0 0.0
    %765 = vmatpush.xpose.msra.mxu0 0.0
    %766 = vmatpush.xpose.msra.mxu0 0.0
    %767 = vmatpush.xpose.msra.mxu0 0.0
    %768 = vmatpush.xpose.msra.mxu0 0.0
    %769 = vmatpush.xpose.msra.mxu0 0.0
    %770 = vmatpush.xpose.msra.mxu0 0.0
    %771 = vmatpush.xpose.msra.mxu0 %v755
    %772 = vmatpush.xpose.msra.mxu0 %v753
    %773 = vmatmul.f32.gmra.mxu0 %v751
    %v774 = vpop.f32.mrf.mxu0
    %v775 = vadd.f32 0.0, %v774
    %776 = vdwg.mxu0
    %v777 = vmul.f32 %v775, 0.35355338
    %v778 = vsel %vm132, %v777, -inf
    %779 = vmax.xlane.f32.xlu0 %v778
    %v780 = vpop.xlane.xlu0 %779
    %v781 = vsub.f32 %v777, %v780
    %v782 = vmul.f32 %v781, 1.442695
    %v783 = vpow.pop %v782
    %v784 = vsel %vm132, %v783, 0.0
    %785 = vadd.xlane.f32.xlu0 %v784
    %v786 = vpop.xlane.xlu0 %785
    %v787 = vrcp.pop %v786
    %v788 = vmul.f32 %v786, %v787
    %v789 = vsub.f32 1.0, %v788
    %v790 = vmul.f32 %v787, %v789
    %v791 = vadd.f32 %v787, %v790
    %vm792 = vweird.f32 %v786
    %vm793 = vweird.f32 %v787
    %vm794 = vmor %vm792, %vm793
    %v795 = vsel %vm794, %v787, %v791
    %v796 = vand.u32 2147483647, %v786
    %vm797 = vcmp.eq.f32.partialorder %v796, 8.507059e+37
    %v798 = vand.u32 %v786, 2147483648
    %v799 = vor.u32 1.1754944e-38, %v798
    %v800 = vsel %vm797, %v799, %v795
    %v801 = vmul.f32 %v783, %v800
    %802 = vrot.lane.b32.xlu0 %v651, 104
    %v803 = vpop.permute.xlu0 %802
    %804 = vrot.lane.b32.xlu0 %v654, 104
    %v805 = vpop.permute.xlu0 %804
    %v809 = vsel %vm132, %v801, 0
    %811 = vmatpush.msra.mxu0 0.0
    %812 = vmatpush.msra.mxu0 0.0
    %813 = vmatpush.msra.mxu0 0.0
    %814 = vmatpush.msra.mxu0 0.0
    %815 = vmatpush.msra.mxu0 0.0
    %816 = vmatpush.msra.mxu0 0.0
    %817 = vmatpush.msra.mxu0 0.0
    %818 = vmatpush.msra.mxu0 0.0
    %819 = vmatpush.msra.mxu0 0.0
    %820 = vmatpush.msra.mxu0 0.0
    %821 = vmatpush.msra.mxu0 0.0
    %822 = vmatpush.msra.mxu0 0.0
    %823 = vmatpush.msra.mxu0 0.0
    %824 = vmatpush.msra.mxu0 0.0
    %825 = vmatpush.msra.mxu0 %v805
    %826 = vmatpush.msra.mxu0 %v803
    %827 = vmatmul.f32.gmra.mxu0 %v809
    %v828 = vpop.f32.mrf.mxu0
    %v829 = vadd.f32 0.0, %v828
    %830 = vdwg.mxu0
    %832 = vrot.lane.b32.xlu0 %v829, 8
    %v833 = vpop.permute.xlu0 %832
    %v835 = vsel %vm160, %v743, %v833
    %v837 = vsel %vm160, %v598, 0
    %v840 = vsel %vm160, %v657, 0
    %v843 = vsel %vm160, %v660, 0
    %845 = vmatpush.xpose.msra.mxu0 0.0
    %846 = vmatpush.xpose.msra.mxu0 0.0
    %847 = vmatpush.xpose.msra.mxu0 0.0
    %848 = vmatpush.xpose.msra.mxu0 0.0
    %849 = vmatpush.xpose.msra.mxu0 0.0
    %850 = vmatpush.xpose.msra.mxu0 0.0
    %851 = vmatpush.xpose.msra.mxu0 0.0
    %852 = vmatpush.xpose.msra.mxu0 0.0
    %853 = vmatpush.xpose.msra.mxu0 0.0
    %854 = vmatpush.xpose.msra.mxu0 0.0
    %855 = vmatpush.xpose.msra.mxu0 0.0
    %856 = vmatpush.xpose.msra.mxu0 0.0
    %857 = vmatpush.xpose.msra.mxu0 0.0
    %858 = vmatpush.xpose.msra.mxu0 0.0
    %859 = vmatpush.xpose.msra.mxu0 %v843
    %860 = vmatpush.xpose.msra.mxu0 %v840
    %861 = vmatmul.f32.gmra.mxu0 %v837
    %v862 = vpop.f32.mrf.mxu0
    %v863 = vadd.f32 0.0, %v862
    %864 = vdwg.mxu0
    %v865 = vmul.f32 %v863, 0.35355338
    %v866 = vsel %vm132, %v865, -inf
    %867 = vmax.xlane.f32.xlu0 %v866
    %v868 = vpop.xlane.xlu0 %867
    %v869 = vsub.f32 %v865, %v868
    %v870 = vmul.f32 %v869, 1.442695
    %v871 = vpow.pop %v870
    %v872 = vsel %vm132, %v871, 0.0
    %873 = vadd.xlane.f32.xlu0 %v872
    %v874 = vpop.xlane.xlu0 %873
    %v875 = vrcp.pop %v874
    %v876 = vmul.f32 %v874, %v875
    %v877 = vsub.f32 1.0, %v876
    %v878 = vmul.f32 %v875, %v877
    %v879 = vadd.f32 %v875, %v878
    %vm880 = vweird.f32 %v874
    %vm881 = vweird.f32 %v875
    %vm882 = vmor %vm880, %vm881
    %v883 = vsel %vm882, %v875, %v879
    %v884 = vand.u32 2147483647, %v874
    %vm885 = vcmp.eq.f32.partialorder %v884, 8.507059e+37
    %v886 = vand.u32 %v874, 2147483648
    %v887 = vor.u32 1.1754944e-38, %v886
    %v888 = vsel %vm885, %v887, %v883
    %v889 = vmul.f32 %v871, %v888
    %890 = vrot.lane.b32.xlu0 %v657, 112
    %v891 = vpop.permute.xlu0 %890
    %892 = vrot.lane.b32.xlu0 %v660, 112
    %v893 = vpop.permute.xlu0 %892
    %v897 = vsel %vm132, %v889, 0
    %899 = vmatpush.msra.mxu0 0.0
    %900 = vmatpush.msra.mxu0 0.0
    %901 = vmatpush.msra.mxu0 0.0
    %902 = vmatpush.msra.mxu0 0.0
    %903 = vmatpush.msra.mxu0 0.0
    %904 = vmatpush.msra.mxu0 0.0
    %905 = vmatpush.msra.mxu0 0.0
    %906 = vmatpush.msra.mxu0 0.0
    %907 = vmatpush.msra.mxu0 0.0
    %908 = vmatpush.msra.mxu0 0.0
    %909 = vmatpush.msra.mxu0 0.0
    %910 = vmatpush.msra.mxu0 0.0
    %911 = vmatpush.msra.mxu0 0.0
    %912 = vmatpush.msra.mxu0 0.0
    %913 = vmatpush.msra.mxu0 %v893
    %914 = vmatpush.msra.mxu0 %v891
    %915 = vmatmul.f32.gmra.mxu0 %v897
    %v916 = vpop.f32.mrf.mxu0
    %v917 = vadd.f32 0.0, %v916
    %918 = vdwg.mxu0
    %919 = vrot.lane.b32.xlu0 %v598, 120
    %v920 = vpop.permute.xlu0 %919
    %921 = vrot.lane.b32.xlu0 %v657, 120
    %v922 = vpop.permute.xlu0 %921
    %923 = vrot.lane.b32.xlu0 %v660, 120
    %v924 = vpop.permute.xlu0 %923
    %v925 = vsel %vm160, %v920, 0
    %v927 = vsel %vm160, %v922, 0
    %v929 = vsel %vm160, %v924, 0
    %931 = vmatpush.xpose.msra.mxu0 0.0
    %932 = vmatpush.xpose.msra.mxu0 0.0
    %933 = vmatpush.xpose.msra.mxu0 0.0
    %934 = vmatpush.xpose.msra.mxu0 0.0
    %935 = vmatpush.xpose.msra.mxu0 0.0
    %936 = vmatpush.xpose.msra.mxu0 0.0
    %937 = vmatpush.xpose.msra.mxu0 0.0
    %938 = vmatpush.xpose.msra.mxu0 0.0
    %939 = vmatpush.xpose.msra.mxu0 0.0
    %940 = vmatpush.xpose.msra.mxu0 0.0
    %941 = vmatpush.xpose.msra.mxu0 0.0
    %942 = vmatpush.xpose.msra.mxu0 0.0
    %943 = vmatpush.xpose.msra.mxu0 0.0
    %944 = vmatpush.xpose.msra.mxu0 0.0
    %945 = vmatpush.xpose.msra.mxu0 %v929
    %946 = vmatpush.xpose.msra.mxu0 %v927
    %947 = vmatmul.f32.gmra.mxu0 %v925
    %v948 = vpop.f32.mrf.mxu0
    %v949 = vadd.f32 0.0, %v948
    %950 = vdwg.mxu0
    %v951 = vmul.f32 %v949, 0.35355338
    %v952 = vsel %vm132, %v951, -inf
    %953 = vmax.xlane.f32.xlu0 %v952
    %v954 = vpop.xlane.xlu0 %953
    %v955 = vsub.f32 %v951, %v954
    %v956 = vmul.f32 %v955, 1.442695
    %v957 = vpow.pop %v956
    %v958 = vsel %vm132, %v957, 0.0
    %959 = vadd.xlane.f32.xlu0 %v958
    %v960 = vpop.xlane.xlu0 %959
    %v961 = vrcp.pop %v960
    %v962 = vmul.f32 %v960, %v961
    %v963 = vsub.f32 1.0, %v962
    %v964 = vmul.f32 %v961, %v963
    %v965 = vadd.f32 %v961, %v964
    %vm966 = vweird.f32 %v960
    %vm967 = vweird.f32 %v961
    %vm968 = vmor %vm966, %vm967
    %v969 = vsel %vm968, %v961, %v965
    %v970 = vand.u32 2147483647, %v960
    %vm971 = vcmp.eq.f32.partialorder %v970, 8.507059e+37
    %v972 = vand.u32 %v960, 2147483648
    %v973 = vor.u32 1.1754944e-38, %v972
    %v974 = vsel %vm971, %v973, %v969
    %v975 = vmul.f32 %v957, %v974
    %976 = vrot.lane.b32.xlu0 %v657, 104
    %v977 = vpop.permute.xlu0 %976
    %978 = vrot.lane.b32.xlu0 %v660, 104
    %v979 = vpop.permute.xlu0 %978
    %v983 = vsel %vm132, %v975, 0
    %985 = vmatpush.msra.mxu0 0.0
    %986 = vmatpush.msra.mxu0 0.0
    %987 = vmatpush.msra.mxu0 0.0
    %988 = vmatpush.msra.mxu0 0.0
    %989 = vmatpush.msra.mxu0 0.0
    %990 = vmatpush.msra.mxu0 0.0
    %991 = vmatpush.msra.mxu0 0.0
    %992 = vmatpush.msra.mxu0 0.0
    %993 = vmatpush.msra.mxu0 0.0
    %994 = vmatpush.msra.mxu0 0.0
    %995 = vmatpush.msra.mxu0 0.0
    %996 = vmatpush.msra.mxu0 0.0
    %997 = vmatpush.msra.mxu0 0.0
    %998 = vmatpush.msra.mxu0 0.0
    %999 = vmatpush.msra.mxu0 %v979
    %1000 = vmatpush.msra.mxu0 %v977
    %1001 = vmatmul.f32.gmra.mxu0 %v983
    %v1002 = vpop.f32.mrf.mxu0
    %v1003 = vadd.f32 0.0, %v1002
    %1004 = vdwg.mxu0
    %1006 = vrot.lane.b32.xlu0 %v1003, 8
    %v1007 = vpop.permute.xlu0 %1006
    %v1009 = vsel %vm160, %v917, %v1007
    %v1010 = vperm.slane %v569, 0
    %v1012 = vsel %vm132, %v835, 0
    %v1015 = vsel %vm132, %v1009, 0
    %1017 = vmatpush.msra.mxu0 0.0
    %1018 = vmatpush.msra.mxu0 0.0
    %1019 = vmatpush.msra.mxu0 0.0
    %1020 = vmatpush.msra.mxu0 0.0
    %1021 = vmatpush.msra.mxu0 0.0
    %1022 = vmatpush.msra.mxu0 0.0
    %1023 = vmatpush.msra.mxu0 0.0
    %1024 = vmatpush.msra.mxu0 0.0
    %1025 = vmatpush.msra.mxu0 0.0
    %1026 = vmatpush.msra.mxu0 0.0
    %1027 = vmatpush.msra.mxu0 0.0
    %1028 = vmatpush.msra.mxu0 0.0
    %1029 = vmatpush.msra.mxu0 0.0
    %1030 = vmatpush.msra.mxu0 0.0
    %1031 = vmatpush.msra.mxu0 %v566
    %1032 = vmatpush.msra.mxu0 %v565
    %1033 = vmatmul.f32.gmra.mxu0 %v1012
    %v1034 = vpop.f32.mrf.mxu0
    %v1035 = vadd.f32 %v1010, %v1034
    %1036 = vmatmul.f32.gmra.mxu0 %v1015
    %v1037 = vpop.f32.mrf.mxu0
    %v1038 = vadd.f32 %v1010, %v1037
    %1039 = vdwg.mxu0
    %v1040 = vadd.f32 %v545, %v1035
    %v1041 = vadd.f32 %v546, %v1038
    %v1042 = vld [vmem:[%s5 + $0x8] sm:$0x1]
    %v1043 = vld [vmem:[%s5 + $0x9] sm:$0x1]
    %v1044 = vsel %vm61, %v1040, 0.0
    %1045 = vadd.xlane.f32.xlu0 %v1044
    %v1046 = vpop.xlane.xlu0 %1045
    %v1047 = vsel %vm61, %v1041, 0.0
    %1048 = vadd.xlane.f32.xlu0 %v1047
    %v1049 = vpop.xlane.xlu0 %1048
    %v1050 = vmul.f32 %v1046, %v502
    %v1051 = vmul.f32 %v1049, %v502
    %v1052 = vsub.f32 %v1040, %v1050
    %v1053 = vsub.f32 %v1041, %v1051
    %v1054 = vmul.f32 %v1052, %v1052
    %v1055 = vmul.f32 %v1053, %v1053
    %v1056 = vsel %vm61, %v1054, 0.0
    %1057 = vadd.xlane.f32.xlu0 %v1056
    %v1058 = vpop.xlane.xlu0 %1057
    %v1059 = vsel %vm61, %v1055, 0.0
    %1060 = vadd.xlane.f32.xlu0 %v1059
    %v1061 = vpop.xlane.xlu0 %1060
    %v1062 = vmul.f32 %v1058, %v502
    %v1063 = vmul.f32 %v1061, %v502
    %v1064 = vadd.f32 %v1062, 1e-05
    %v1065 = vadd.f32 %v1063, 1e-05
    %v1066 = vrsqrt.pop %v1064
    %v1067 = vmul.f32 %v1066, %v1064
    %v1068 = vmul.f32 %v1067, %v1066
    %v1069 = vmul.f32 0.5, %v1068
    %v1070 = vsub.f32 1.5, %v1069
    %v1071 = vmul.f32 %v1066, %v1070
    %vm1072 = vweird.f32 %v1064
    %vm1073 = vweird.f32 %v1066
    %vm1074 = vmor %vm1072, %vm1073
    %v1075 = vsel %vm1074, %v1066, %v1071
    %v1076 = vrsqrt.pop %v1065
    %v1077 = vmul.f32 %v1076, %v1065
    %v1078 = vmul.f32 %v1077, %v1076
    %v1079 = vmul.f32 0.5, %v1078
    %v1080 = vsub.f32 1.5, %v1079
    %v1081 = vmul.f32 %v1076, %v1080
    %vm1082 = vweird.f32 %v1065
    %vm1083 = vweird.f32 %v1076
    %vm1084 = vmor %vm1082, %vm1083
    %v1085 = vsel %vm1084, %v1076, %v1081
    %v1086 = vmul.f32 %v1052, %v1075
    %v1087 = vmul.f32 %v1053, %v1085
    %v1088 = vperm.slane %v1042, 0
    %v1089 = vmul.f32 %v1086, %v1088
    %v1090 = vmul.f32 %v1087, %v1088
    %v1091 = vperm.slane %v1043, 0
    %v1092 = vadd.f32 %v1089, %v1091
    %v1093 = vadd.f32 %v1090, %v1091
    %v1094 = vld [vmem:[%s4 + $0xf0] sm:$0xff]
    %v1095 = vld [vmem:[%s4 + $0xf8] sm:$0xff]
    %v1096 = vld [vmem:[%s4 + $0x100] sm:$0xff]
    %v1097 = vld [vmem:[%s4 + $0x108] sm:$0xff]
    %v1098 = vld [vmem:[%s5 + $0xa] sm:$0x1]
    %v1099 = vperm.slane %v1098, 0
    %v1101 = vsel %vm61, %v1092, 0
    %v1104 = vsel %vm61, %v1093, 0
    %1106 = vmatpush.msra.mxu0 0.0
    %1107 = vmatpush.msra.mxu0 0.0
    %1108 = vmatpush.msra.mxu0 0.0
    %1109 = vmatpush.msra.mxu0 0.0
    %1110 = vmatpush.msra.mxu0 0.0
    %1111 = vmatpush.msra.mxu0 0.0
    %1112 = vmatpush.msra.mxu0 0.0
    %1113 = vmatpush.msra.mxu0 0.0
    %1114 = vmatpush.msra.mxu0 0.0
    %1115 = vmatpush.msra.mxu0 0.0
    %1116 = vmatpush.msra.mxu0 0.0
    %1117 = vmatpush.msra.mxu0 0.0
    %1118 = vmatpush.msra.mxu0 %v1097
    %1119 = vmatpush.msra.mxu0 %v1096
    %1120 = vmatpush.msra.mxu0 %v1095
    %1121 = vmatpush.msra.mxu0 %v1094
    %1122 = vmatmul.f32.gmra.mxu0 %v1101
    %v1123 = vpop.f32.mrf.mxu0
    %v1124 = vadd.f32 %v1099, %v1123
    %1125 = vmatmul.f32.gmra.mxu0 %v1104
    %v1126 = vpop.f32.mrf.mxu0
    %v1127 = vadd.f32 %v1099, %v1126
    %1128 = vdwg.mxu0
    %v1129 = vmax.f32 %v1124, 0.0
    %v1130 = vmax.f32 %v1127, 0.0
    %v1131 = vld [vmem:[%s4 + $0x110] sm:$0xff]
    %v1132 = vld [vmem:[%s4 + $0x118] sm:$0xff]
    %v1133 = vld [vmem:[%s4 + $0x120] sm:$0xff]
    %v1134 = vld [vmem:[%s4 + $0x128] sm:$0xff]
    %v1135 = vld [vmem:[%s4 + $0x130] sm:$0xff]
    %v1136 = vld [vmem:[%s4 + $0x138] sm:$0xff]
    %v1137 = vld [vmem:[%s4 + $0x140] sm:$0xff]
    %v1138 = vld [vmem:[%s4 + $0x148] sm:$0xff]
    %v1139 = vld [vmem:[%s5 + $0xb] sm:$0x1]
    %v1140 = vperm.slane %v1139, 0
    %v1142 = vsel %vm102, %v1129, 0
    %v1145 = vsel %vm102, %v1130, 0
    %1147 = vmatpush.msra.mxu0 0.0
    %1148 = vmatpush.msra.mxu0 0.0
    %1149 = vmatpush.msra.mxu0 0.0
    %1150 = vmatpush.msra.mxu0 0.0
    %1151 = vmatpush.msra.mxu0 0.0
    %1152 = vmatpush.msra.mxu0 0.0
    %1153 = vmatpush.msra.mxu0 0.0
    %1154 = vmatpush.msra.mxu0 0.0
    %1155 = vmatpush.msra.mxu0 %v1138
    %1156 = vmatpush.msra.mxu0 %v1137
    %1157 = vmatpush.msra.mxu0 %v1136
    %1158 = vmatpush.msra.mxu0 %v1135
    %1159 = vmatpush.msra.mxu0 %v1134
    %1160 = vmatpush.msra.mxu0 %v1133
    %1161 = vmatpush.msra.mxu0 %v1132
    %1162 = vmatpush.msra.mxu0 %v1131
    %1163 = vmatmul.f32.gmra.mxu0 %v1142
    %v1164 = vpop.f32.mrf.mxu0
    %v1165 = vadd.f32 %v1140, %v1164
    %1166 = vmatmul.f32.gmra.mxu0 %v1145
    %v1167 = vpop.f32.mrf.mxu0
    %v1168 = vadd.f32 %v1140, %v1167
    %1169 = vdwg.mxu0
    %v1170 = vadd.f32 %v1092, %v1165
    %v1171 = vadd.f32 %v1093, %v1168
    %v1172 = vld [vmem:[%s5 + $0xc] sm:$0x1]
    %v1173 = vld [vmem:[%s5 + $0xd] sm:$0x1]
    %v1174 = vsel %vm61, %v1170, 0.0
    %1175 = vadd.xlane.f32.xlu0 %v1174
    %v1176 = vpop.xlane.xlu0 %1175
    %v1177 = vsel %vm61, %v1171, 0.0
    %1178 = vadd.xlane.f32.xlu0 %v1177
    %v1179 = vpop.xlane.xlu0 %1178
    %v1180 = vmul.f32 %v1176, %v502
    %v1181 = vmul.f32 %v1179, %v502
    %v1182 = vsub.f32 %v1170, %v1180
    %v1183 = vsub.f32 %v1171, %v1181
    %v1184 = vmul.f32 %v1182, %v1182
    %v1185 = vmul.f32 %v1183, %v1183
    %v1186 = vsel %vm61, %v1184, 0.0
    %1187 = vadd.xlane.f32.xlu0 %v1186
    %v1188 = vpop.xlane.xlu0 %1187
    %v1189 = vsel %vm61, %v1185, 0.0
    %1190 = vadd.xlane.f32.xlu0 %v1189
    %v1191 = vpop.xlane.xlu0 %1190
    %v1192 = vmul.f32 %v1188, %v502
    %v1193 = vmul.f32 %v1191, %v502
    %v1194 = vadd.f32 %v1192, 1e-05
    %v1195 = vadd.f32 %v1193, 1e-05
    %v1196 = vrsqrt.pop %v1194
    %v1197 = vmul.f32 %v1196, %v1194
    %v1198 = vmul.f32 %v1197, %v1196
    %v1199 = vmul.f32 0.5, %v1198
    %v1200 = vsub.f32 1.5, %v1199
    %v1201 = vmul.f32 %v1196, %v1200
    %vm1202 = vweird.f32 %v1194
    %vm1203 = vweird.f32 %v1196
    %vm1204 = vmor %vm1202, %vm1203
    %v1205 = vsel %vm1204, %v1196, %v1201
    %v1206 = vrsqrt.pop %v1195
    %v1207 = vmul.f32 %v1206, %v1195
    %v1208 = vmul.f32 %v1207, %v1206
    %v1209 = vmul.f32 0.5, %v1208
    %v1210 = vsub.f32 1.5, %v1209
    %v1211 = vmul.f32 %v1206, %v1210
    %vm1212 = vweird.f32 %v1195
    %vm1213 = vweird.f32 %v1206
    %vm1214 = vmor %vm1212, %vm1213
    %v1215 = vsel %vm1214, %v1206, %v1211
    %v1216 = vmul.f32 %v1182, %v1205
    %v1217 = vmul.f32 %v1183, %v1215
    %v1218 = vperm.slane %v1172, 0
    %v1219 = vmul.f32 %v1216, %v1218
    %v1220 = vmul.f32 %v1217, %v1218
    %v1221 = vperm.slane %v1173, 0
    %v1222 = vadd.f32 %v1219, %v1221
    %v1223 = vadd.f32 %v1220, %v1221
    %v1224 = vadd.f32 %v1222, %v33
    %v1225 = vadd.f32 %v1223, %v34
    %v1226 = vld [vmem:[%s4 + $0x150] sm:$0xff]
    %v1227 = vld [vmem:[%s4 + $0x158] sm:$0xff]
    %v1228 = vld [vmem:[%s4 + $0x160] sm:$0xff]
    %v1229 = vld [vmem:[%s4 + $0x168] sm:$0xff]
    %v1230 = vld [vmem:[%s4 + $0x170] sm:$0xff]
    %v1231 = vld [vmem:[%s4 + $0x178] sm:$0xff]
    %v1232 = vld [vmem:[%s4 + $0x180] sm:$0xff]
    %v1233 = vld [vmem:[%s4 + $0x188] sm:$0xff]
    %v1234 = vld [vmem:[%s4 + $0x190] sm:$0xff]
    %v1235 = vld [vmem:[%s4 + $0x198] sm:$0xff]
    %v1236 = vld [vmem:[%s4 + $0x1a0] sm:$0xff]
    %v1237 = vld [vmem:[%s4 + $0x1a8] sm:$0xff]
    %v1238 = vld [vmem:[%s4 + $0x1b0] sm:$0xff]
    %v1239 = vld [vmem:[%s4 + $0x1b8] sm:$0xff]
    %v1240 = vld [vmem:[%s5 + $0x10] sm:$0x1]
    %v1241 = vld [vmem:[%s5 + $0x11] sm:$0x1]
    %v1242 = vld [vmem:[%s5 + $0x12] sm:$0x1]
    %v1243 = vperm.slane %v1240, 0
    %v1245 = vsel %vm61, %v549, 0
    %v1248 = vsel %vm61, %v550, 0
    %v1251 = vsel %vm61, %v551, 0
    %v1254 = vsel %vm61, %v552, 0
    %1256 = vmatpush.msra.mxu0 0.0
    %1257 = vmatpush.msra.mxu0 0.0
    %1258 = vmatpush.msra.mxu0 0.0
    %1259 = vmatpush.msra.mxu0 0.0
    %1260 = vmatpush.msra.mxu0 0.0
    %1261 = vmatpush.msra.mxu0 0.0
    %1262 = vmatpush.msra.mxu0 0.0
    %1263 = vmatpush.msra.mxu0 0.0
    %1264 = vmatpush.msra.mxu0 0.0
    %1265 = vmatpush.msra.mxu0 0.0
    %1266 = vmatpush.msra.mxu0 0.0
    %1267 = vmatpush.msra.mxu0 0.0
    %1268 = vmatpush.msra.mxu0 %v1229
    %1269 = vmatpush.msra.mxu0 %v1228
    %1270 = vmatpush.msra.mxu0 %v1227
    %1271 = vmatpush.msra.mxu0 %v1226
    %1272 = vmatmul.f32.gmra.mxu0 %v1245
    %v1273 = vpop.f32.mrf.mxu0
    %v1274 = vadd.f32 %v1243, %v1273
    %1275 = vmatmul.f32.gmra.mxu0 %v1248
    %v1276 = vpop.f32.mrf.mxu0
    %v1277 = vadd.f32 %v1243, %v1276
    %1278 = vmatmul.f32.gmra.mxu0 %v1251
    %v1279 = vpop.f32.mrf.mxu0
    %v1280 = vadd.f32 %v1243, %v1279
    %1281 = vmatmul.f32.gmra.mxu0 %v1254
    %v1282 = vpop.f32.mrf.mxu0
    %v1283 = vadd.f32 %v1243, %v1282
    %1284 = vdwg.mxu0
    %1287 = vrot.lane.b32.xlu0 %v1222, 32
    %v1288 = vpop.permute.xlu0 %1287
    %1289 = vrot.lane.b32.xlu0 %v1223, 32
    %v1290 = vpop.permute.xlu0 %1289
    %v1293 = vsel %vm61, %v1224, %v1288
    %v1294 = vsel %vm61, %v1225, %v1290
    %v1295 = vperm.slane %v1241, 0
    %v1297 = vsel %vm102, %v1293, 0
    %v1300 = vsel %vm102, %v1294, 0
    %1302 = vmatpush.msra.mxu0 0.0
    %1303 = vmatpush.msra.mxu0 0.0
    %1304 = vmatpush.msra.mxu0 0.0
    %1305 = vmatpush.msra.mxu0 0.0
    %1306 = vmatpush.msra.mxu0 0.0
    %1307 = vmatpush.msra.mxu0 0.0
    %1308 = vmatpush.msra.mxu0 0.0
    %1309 = vmatpush.msra.mxu0 0.0
    %1310 = vmatpush.msra.mxu0 %v1237
    %1311 = vmatpush.msra.mxu0 %v1236
    %1312 = vmatpush.msra.mxu0 %v1235
    %1313 = vmatpush.msra.mxu0 %v1234
    %1314 = vmatpush.msra.mxu0 %v1233
    %1315 = vmatpush.msra.mxu0 %v1232
    %1316 = vmatpush.msra.mxu0 %v1231
    %1317 = vmatpush.msra.mxu0 %v1230
    %1318 = vmatmul.f32.gmra.mxu0 %v1297
    %v1319 = vpop.f32.mrf.mxu0
    %v1320 = vadd.f32 %v1295, %v1319
    %1321 = vmatmul.f32.gmra.mxu0 %v1300
    %v1322 = vpop.f32.mrf.mxu0
    %v1323 = vadd.f32 %v1295, %v1322
    %1324 = vdwg.mxu0
    %v1326 = vsel %vm160, %v1274, 0
    %v1329 = vsel %vm160, %v1277, 0
    %v1332 = vsel %vm160, %v1320, 0
    %1334 = vmatpush.xpose.msra.mxu0 0.0
    %1335 = vmatpush.xpose.msra.mxu0 0.0
    %1336 = vmatpush.xpose.msra.mxu0 0.0
    %1337 = vmatpush.xpose.msra.mxu0 0.0
    %1338 = vmatpush.xpose.msra.mxu0 0.0
    %1339 = vmatpush.xpose.msra.mxu0 0.0
    %1340 = vmatpush.xpose.msra.mxu0 0.0
    %1341 = vmatpush.xpose.msra.mxu0 0.0
    %1342 = vmatpush.xpose.msra.mxu0 0.0
    %1343 = vmatpush.xpose.msra.mxu0 0.0
    %1344 = vmatpush.xpose.msra.mxu0 0.0
    %1345 = vmatpush.xpose.msra.mxu0 0.0
    %1346 = vmatpush.xpose.msra.mxu0 0.0
    %1347 = vmatpush.xpose.msra.mxu0 0.0
    %1348 = vmatpush.xpose.msra.mxu0 0.0
    %1349 = vmatpush.xpose.msra.mxu0 %v1332
    %1350 = vmatmul.f32.gmra.mxu0 %v1326
    %v1351 = vpop.f32.mrf.mxu0
    %v1352 = vadd.f32 0.0, %v1351
    %1353 = vmatmul.f32.gmra.mxu0 %v1329
    %v1354 = vpop.f32.mrf.mxu0
    %v1355 = vadd.f32 0.0, %v1354
    %1356 = vdwg.mxu0
    %v1357 = vmul.f32 %v1352, 0.35355338
    %v1358 = vmul.f32 %v1355, 0.35355338
    %v1359 = vsel %vm160, %v1357, -inf
    %1360 = vmax.xlane.f32.xlu0 %v1359
    %v1361 = vpop.xlane.xlu0 %1360
    %v1362 = vsel %vm160, %v1358, -inf
    %1363 = vmax.xlane.f32.xlu0 %v1362
    %v1364 = vpop.xlane.xlu0 %1363
    %v1365 = vsub.f32 %v1357, %v1361
    %v1366 = vsub.f32 %v1358, %v1364
    %v1367 = vmul.f32 %v1365, 1.442695
    %v1368 = vpow.pop %v1367
    %v1369 = vmul.f32 %v1366, 1.442695
    %v1370 = vpow.pop %v1369
    %v1371 = vsel %vm160, %v1368, 0.0
    %1372 = vadd.xlane.f32.xlu0 %v1371
    %v1373 = vpop.xlane.xlu0 %1372
    %v1374 = vsel %vm160, %v1370, 0.0
    %1375 = vadd.xlane.f32.xlu0 %v1374
    %v1376 = vpop.xlane.xlu0 %1375
    %v1377 = vrcp.pop %v1373
    %v1378 = vmul.f32 %v1373, %v1377
    %v1379 = vsub.f32 1.0, %v1378
    %v1380 = vmul.f32 %v1377, %v1379
    %v1381 = vadd.f32 %v1377, %v1380
    %vm1382 = vweird.f32 %v1373
    %vm1383 = vweird.f32 %v1377
    %vm1384 = vmor %vm1382, %vm1383
    %v1385 = vsel %vm1384, %v1377, %v1381
    %v1386 = vand.u32 2147483647, %v1373
    %vm1387 = vcmp.eq.f32.partialorder %v1386, 8.507059e+37
    %v1388 = vand.u32 %v1373, 2147483648
    %v1389 = vor.u32 1.1754944e-38, %v1388
    %v1390 = vsel %vm1387, %v1389, %v1385
    %v1391 = vmul.f32 %v1368, %v1390
    %v1392 = vrcp.pop %v1376
    %v1393 = vmul.f32 %v1376, %v1392
    %v1394 = vsub.f32 1.0, %v1393
    %v1395 = vmul.f32 %v1392, %v1394
    %v1396 = vadd.f32 %v1392, %v1395
    %vm1397 = vweird.f32 %v1376
    %vm1398 = vweird.f32 %v1392
    %vm1399 = vmor %vm1397, %vm1398
    %v1400 = vsel %vm1399, %v1392, %v1396
    %v1401 = vand.u32 2147483647, %v1376
    %vm1402 = vcmp.eq.f32.partialorder %v1401, 8.507059e+37
    %v1403 = vand.u32 %v1376, 2147483648
    %v1404 = vor.u32 1.1754944e-38, %v1403
    %v1405 = vsel %vm1402, %v1404, %v1400
    %v1406 = vmul.f32 %v1370, %v1405
    %1407 = vrot.lane.b32.xlu0 %v1320, 112
    %v1408 = vpop.permute.xlu0 %1407
    %v1411 = vsel %vm160, %v1391, 0
    %v1414 = vsel %vm160, %v1406, 0
    %1416 = vmatpush.msra.mxu0 0.0
    %1417 = vmatpush.msra.mxu0 0.0
    %1418 = vmatpush.msra.mxu0 0.0
    %1419 = vmatpush.msra.mxu0 0.0
    %1420 = vmatpush.msra.mxu0 0.0
    %1421 = vmatpush.msra.mxu0 0.0
    %1422 = vmatpush.msra.mxu0 0.0
    %1423 = vmatpush.msra.mxu0 0.0
    %1424 = vmatpush.msra.mxu0 0.0
    %1425 = vmatpush.msra.mxu0 0.0
    %1426 = vmatpush.msra.mxu0 0.0
    %1427 = vmatpush.msra.mxu0 0.0
    %1428 = vmatpush.msra.mxu0 0.0
    %1429 = vmatpush.msra.mxu0 0.0
    %1430 = vmatpush.msra.mxu0 0.0
    %1431 = vmatpush.msra.mxu0 %v1408
    %1432 = vmatmul.f32.gmra.mxu0 %v1411
    %v1433 = vpop.f32.mrf.mxu0
    %v1434 = vadd.f32 0.0, %v1433
    %1435 = vmatmul.f32.gmra.mxu0 %v1414
    %v1436 = vpop.f32.mrf.mxu0
    %v1437 = vadd.f32 0.0, %v1436
    %1438 = vdwg.mxu0
    %1439 = vrot.lane.b32.xlu0 %v1274, 120
    %v1440 = vpop.permute.xlu0 %1439
    %1441 = vrot.lane.b32.xlu0 %v1277, 120
    %v1442 = vpop.permute.xlu0 %1441
    %1443 = vrot.lane.b32.xlu0 %v1320, 120
    %v1444 = vpop.permute.xlu0 %1443
    %v1445 = vsel %vm160, %v1440, 0
    %v1447 = vsel %vm160, %v1442, 0
    %v1449 = vsel %vm160, %v1444, 0
    %1451 = vmatpush.xpose.msra.mxu0 0.0
    %1452 = vmatpush.xpose.msra.mxu0 0.0
    %1453 = vmatpush.xpose.msra.mxu0 0.0
    %1454 = vmatpush.xpose.msra.mxu0 0.0
    %1455 = vmatpush.xpose.msra.mxu0 0.0
    %1456 = vmatpush.xpose.msra.mxu0 0.0
    %1457 = vmatpush.xpose.msra.mxu0 0.0
    %1458 = vmatpush.xpose.msra.mxu0 0.0
    %1459 = vmatpush.xpose.msra.mxu0 0.0
    %1460 = vmatpush.xpose.msra.mxu0 0.0
    %1461 = vmatpush.xpose.msra.mxu0 0.0
    %1462 = vmatpush.xpose.msra.mxu0 0.0
    %1463 = vmatpush.xpose.msra.mxu0 0.0
    %1464 = vmatpush.xpose.msra.mxu0 0.0
    %1465 = vmatpush.xpose.msra.mxu0 0.0
    %1466 = vmatpush.xpose.msra.mxu0 %v1449
    %1467 = vmatmul.f32.gmra.mxu0 %v1445
    %v1468 = vpop.f32.mrf.mxu0
    %v1469 = vadd.f32 0.0, %v1468
    %1470 = vmatmul.f32.gmra.mxu0 %v1447
    %v1471 = vpop.f32.mrf.mxu0
    %v1472 = vadd.f32 0.0, %v1471
    %1473 = vdwg.mxu0
    %v1474 = vmul.f32 %v1469, 0.35355338
    %v1475 = vmul.f32 %v1472, 0.35355338
    %v1476 = vsel %vm160, %v1474, -inf
    %1477 = vmax.xlane.f32.xlu0 %v1476
    %v1478 = vpop.xlane.xlu0 %1477
    %v1479 = vsel %vm160, %v1475, -inf
    %1480 = vmax.xlane.f32.xlu0 %v1479
    %v1481 = vpop.xlane.xlu0 %1480
    %v1482 = vsub.f32 %v1474, %v1478
    %v1483 = vsub.f32 %v1475, %v1481
    %v1484 = vmul.f32 %v1482, 1.442695
    %v1485 = vpow.pop %v1484
    %v1486 = vmul.f32 %v1483, 1.442695
    %v1487 = vpow.pop %v1486
    %v1488 = vsel %vm160, %v1485, 0.0
    %1489 = vadd.xlane.f32.xlu0 %v1488
    %v1490 = vpop.xlane.xlu0 %1489
    %v1491 = vsel %vm160, %v1487, 0.0
    %1492 = vadd.xlane.f32.xlu0 %v1491
    %v1493 = vpop.xlane.xlu0 %1492
    %v1494 = vrcp.pop %v1490
    %v1495 = vmul.f32 %v1490, %v1494
    %v1496 = vsub.f32 1.0, %v1495
    %v1497 = vmul.f32 %v1494, %v1496
    %v1498 = vadd.f32 %v1494, %v1497
    %vm1499 = vweird.f32 %v1490
    %vm1500 = vweird.f32 %v1494
    %vm1501 = vmor %vm1499, %vm1500
    %v1502 = vsel %vm1501, %v1494, %v1498
    %v1503 = vand.u32 2147483647, %v1490
    %vm1504 = vcmp.eq.f32.partialorder %v1503, 8.507059e+37
    %v1505 = vand.u32 %v1490, 2147483648
    %v1506 = vor.u32 1.1754944e-38, %v1505
    %v1507 = vsel %vm1504, %v1506, %v1502
    %v1508 = vmul.f32 %v1485, %v1507
    %v1509 = vrcp.pop %v1493
    %v1510 = vmul.f32 %v1493, %v1509
    %v1511 = vsub.f32 1.0, %v1510
    %v1512 = vmul.f32 %v1509, %v1511
    %v1513 = vadd.f32 %v1509, %v1512
    %vm1514 = vweird.f32 %v1493
    %vm1515 = vweird.f32 %v1509
    %vm1516 = vmor %vm1514, %vm1515
    %v1517 = vsel %vm1516, %v1509, %v1513
    %v1518 = vand.u32 2147483647, %v1493
    %vm1519 = vcmp.eq.f32.partialorder %v1518, 8.507059e+37
    %v1520 = vand.u32 %v1493, 2147483648
    %v1521 = vor.u32 1.1754944e-38, %v1520
    %v1522 = vsel %vm1519, %v1521, %v1517
    %v1523 = vmul.f32 %v1487, %v1522
    %1524 = vrot.lane.b32.xlu0 %v1320, 104
    %v1525 = vpop.permute.xlu0 %1524
    %v1528 = vsel %vm160, %v1508, 0
    %v1531 = vsel %vm160, %v1523, 0
    %1533 = vmatpush.msra.mxu0 0.0
    %1534 = vmatpush.msra.mxu0 0.0
    %1535 = vmatpush.msra.mxu0 0.0
    %1536 = vmatpush.msra.mxu0 0.0
    %1537 = vmatpush.msra.mxu0 0.0
    %1538 = vmatpush.msra.mxu0 0.0
    %1539 = vmatpush.msra.mxu0 0.0
    %1540 = vmatpush.msra.mxu0 0.0
    %1541 = vmatpush.msra.mxu0 0.0
    %1542 = vmatpush.msra.mxu0 0.0
    %1543 = vmatpush.msra.mxu0 0.0
    %1544 = vmatpush.msra.mxu0 0.0
    %1545 = vmatpush.msra.mxu0 0.0
    %1546 = vmatpush.msra.mxu0 0.0
    %1547 = vmatpush.msra.mxu0 0.0
    %1548 = vmatpush.msra.mxu0 %v1525
    %1549 = vmatmul.f32.gmra.mxu0 %v1528
    %v1550 = vpop.f32.mrf.mxu0
    %v1551 = vadd.f32 0.0, %v1550
    %1552 = vmatmul.f32.gmra.mxu0 %v1531
    %v1553 = vpop.f32.mrf.mxu0
    %v1554 = vadd.f32 0.0, %v1553
    %1555 = vdwg.mxu0
    %1558 = vrot.lane.b32.xlu0 %v1551, 8
    %v1559 = vpop.permute.xlu0 %1558
    %1560 = vrot.lane.b32.xlu0 %v1554, 8
    %v1561 = vpop.permute.xlu0 %1560
    %v1564 = vsel %vm160, %v1434, %v1559
    %v1565 = vsel %vm160, %v1437, %v1561
    %v1567 = vsel %vm160, %v1280, 0
    %v1570 = vsel %vm160, %v1283, 0
    %v1573 = vsel %vm160, %v1323, 0
    %1575 = vmatpush.xpose.msra.mxu0 0.0
    %1576 = vmatpush.xpose.msra.mxu0 0.0
    %1577 = vmatpush.xpose.msra.mxu0 0.0
    %1578 = vmatpush.xpose.msra.mxu0 0.0
    %1579 = vmatpush.xpose.msra.mxu0 0.0
    %1580 = vmatpush.xpose.msra.mxu0 0.0
    %1581 = vmatpush.xpose.msra.mxu0 0.0
    %1582 = vmatpush.xpose.msra.mxu0 0.0
    %1583 = vmatpush.xpose.msra.mxu0 0.0
    %1584 = vmatpush.xpose.msra.mxu0 0.0
    %1585 = vmatpush.xpose.msra.mxu0 0.0
    %1586 = vmatpush.xpose.msra.mxu0 0.0
    %1587 = vmatpush.xpose.msra.mxu0 0.0
    %1588 = vmatpush.xpose.msra.mxu0 0.0
    %1589 = vmatpush.xpose.msra.mxu0 0.0
    %1590 = vmatpush.xpose.msra.mxu0 %v1573
    %1591 = vmatmul.f32.gmra.mxu0 %v1567
    %v1592 = vpop.f32.mrf.mxu0
    %v1593 = vadd.f32 0.0, %v1592
    %1594 = vmatmul.f32.gmra.mxu0 %v1570
    %v1595 = vpop.f32.mrf.mxu0
    %v1596 = vadd.f32 0.0, %v1595
    %1597 = vdwg.mxu0
    %v1598 = vmul.f32 %v1593, 0.35355338
    %v1599 = vmul.f32 %v1596, 0.35355338
    %v1600 = vsel %vm160, %v1598, -inf
    %1601 = vmax.xlane.f32.xlu0 %v1600
    %v1602 = vpop.xlane.xlu0 %1601
    %v1603 = vsel %vm160, %v1599, -inf
    %1604 = vmax.xlane.f32.xlu0 %v1603
    %v1605 = vpop.xlane.xlu0 %1604
    %v1606 = vsub.f32 %v1598, %v1602
    %v1607 = vsub.f32 %v1599, %v1605
    %v1608 = vmul.f32 %v1606, 1.442695
    %v1609 = vpow.pop %v1608
    %v1610 = vmul.f32 %v1607, 1.442695
    %v1611 = vpow.pop %v1610
    %v1612 = vsel %vm160, %v1609, 0.0
    %1613 = vadd.xlane.f32.xlu0 %v1612
    %v1614 = vpop.xlane.xlu0 %1613
    %v1615 = vsel %vm160, %v1611, 0.0
    %1616 = vadd.xlane.f32.xlu0 %v1615
    %v1617 = vpop.xlane.xlu0 %1616
    %v1618 = vrcp.pop %v1614
    %v1619 = vmul.f32 %v1614, %v1618
    %v1620 = vsub.f32 1.0, %v1619
    %v1621 = vmul.f32 %v1618, %v1620
    %v1622 = vadd.f32 %v1618, %v1621
    %vm1623 = vweird.f32 %v1614
    %vm1624 = vweird.f32 %v1618
    %vm1625 = vmor %vm1623, %vm1624
    %v1626 = vsel %vm1625, %v1618, %v1622
    %v1627 = vand.u32 2147483647, %v1614
    %vm1628 = vcmp.eq.f32.partialorder %v1627, 8.507059e+37
    %v1629 = vand.u32 %v1614, 2147483648
    %v1630 = vor.u32 1.1754944e-38, %v1629
    %v1631 = vsel %vm1628, %v1630, %v1626
    %v1632 = vmul.f32 %v1609, %v1631
    %v1633 = vrcp.pop %v1617
    %v1634 = vmul.f32 %v1617, %v1633
    %v1635 = vsub.f32 1.0, %v1634
    %v1636 = vmul.f32 %v1633, %v1635
    %v1637 = vadd.f32 %v1633, %v1636
    %vm1638 = vweird.f32 %v1617
    %vm1639 = vweird.f32 %v1633
    %vm1640 = vmor %vm1638, %vm1639
    %v1641 = vsel %vm1640, %v1633, %v1637
    %v1642 = vand.u32 2147483647, %v1617
    %vm1643 = vcmp.eq.f32.partialorder %v1642, 8.507059e+37
    %v1644 = vand.u32 %v1617, 2147483648
    %v1645 = vor.u32 1.1754944e-38, %v1644
    %v1646 = vsel %vm1643, %v1645, %v1641
    %v1647 = vmul.f32 %v1611, %v1646
    %1648 = vrot.lane.b32.xlu0 %v1323, 112
    %v1649 = vpop.permute.xlu0 %1648
    %v1652 = vsel %vm160, %v1632, 0
    %v1655 = vsel %vm160, %v1647, 0
    %1657 = vmatpush.msra.mxu0 0.0
    %1658 = vmatpush.msra.mxu0 0.0
    %1659 = vmatpush.msra.mxu0 0.0
    %1660 = vmatpush.msra.mxu0 0.0
    %1661 = vmatpush.msra.mxu0 0.0
    %1662 = vmatpush.msra.mxu0 0.0
    %1663 = vmatpush.msra.mxu0 0.0
    %1664 = vmatpush.msra.mxu0 0.0
    %1665 = vmatpush.msra.mxu0 0.0
    %1666 = vmatpush.msra.mxu0 0.0
    %1667 = vmatpush.msra.mxu0 0.0
    %1668 = vmatpush.msra.mxu0 0.0
    %1669 = vmatpush.msra.mxu0 0.0
    %1670 = vmatpush.msra.mxu0 0.0
    %1671 = vmatpush.msra.mxu0 0.0
    %1672 = vmatpush.msra.mxu0 %v1649
    %1673 = vmatmul.f32.gmra.mxu0 %v1652
    %v1674 = vpop.f32.mrf.mxu0
    %v1675 = vadd.f32 0.0, %v1674
    %1676 = vmatmul.f32.gmra.mxu0 %v1655
    %v1677 = vpop.f32.mrf.mxu0
    %v1678 = vadd.f32 0.0, %v1677
    %1679 = vdwg.mxu0
    %1680 = vrot.lane.b32.xlu0 %v1280, 120
    %v1681 = vpop.permute.xlu0 %1680
    %1682 = vrot.lane.b32.xlu0 %v1283, 120
    %v1683 = vpop.permute.xlu0 %1682
    %1684 = vrot.lane.b32.xlu0 %v1323, 120
    %v1685 = vpop.permute.xlu0 %1684
    %v1686 = vsel %vm160, %v1681, 0
    %v1688 = vsel %vm160, %v1683, 0
    %v1690 = vsel %vm160, %v1685, 0
    %1692 = vmatpush.xpose.msra.mxu0 0.0
    %1693 = vmatpush.xpose.msra.mxu0 0.0
    %1694 = vmatpush.xpose.msra.mxu0 0.0
    %1695 = vmatpush.xpose.msra.mxu0 0.0
    %1696 = vmatpush.xpose.msra.mxu0 0.0
    %1697 = vmatpush.xpose.msra.mxu0 0.0
    %1698 = vmatpush.xpose.msra.mxu0 0.0
    %1699 = vmatpush.xpose.msra.mxu0 0.0
    %1700 = vmatpush.xpose.msra.mxu0 0.0
    %1701 = vmatpush.xpose.msra.mxu0 0.0
    %1702 = vmatpush.xpose.msra.mxu0 0.0
    %1703 = vmatpush.xpose.msra.mxu0 0.0
    %1704 = vmatpush.xpose.msra.mxu0 0.0
    %1705 = vmatpush.xpose.msra.mxu0 0.0
    %1706 = vmatpush.xpose.msra.mxu0 0.0
    %1707 = vmatpush.xpose.msra.mxu0 %v1690
    %1708 = vmatmul.f32.gmra.mxu0 %v1686
    %v1709 = vpop.f32.mrf.mxu0
    %v1710 = vadd.f32 0.0, %v1709
    %1711 = vmatmul.f32.gmra.mxu0 %v1688
    %v1712 = vpop.f32.mrf.mxu0
    %v1713 = vadd.f32 0.0, %v1712
    %1714 = vdwg.mxu0
    %v1715 = vmul.f32 %v1710, 0.35355338
    %v1716 = vmul.f32 %v1713, 0.35355338
    %v1717 = vsel %vm160, %v1715, -inf
    %1718 = vmax.xlane.f32.xlu0 %v1717
    %v1719 = vpop.xlane.xlu0 %1718
    %v1720 = vsel %vm160, %v1716, -inf
    %1721 = vmax.xlane.f32.xlu0 %v1720
    %v1722 = vpop.xlane.xlu0 %1721
    %v1723 = vsub.f32 %v1715, %v1719
    %v1724 = vsub.f32 %v1716, %v1722
    %v1725 = vmul.f32 %v1723, 1.442695
    %v1726 = vpow.pop %v1725
    %v1727 = vmul.f32 %v1724, 1.442695
    %v1728 = vpow.pop %v1727
    %v1729 = vsel %vm160, %v1726, 0.0
    %1730 = vadd.xlane.f32.xlu0 %v1729
    %v1731 = vpop.xlane.xlu0 %1730
    %v1732 = vsel %vm160, %v1728, 0.0
    %1733 = vadd.xlane.f32.xlu0 %v1732
    %v1734 = vpop.xlane.xlu0 %1733
    %v1735 = vrcp.pop %v1731
    %v1736 = vmul.f32 %v1731, %v1735
    %v1737 = vsub.f32 1.0, %v1736
    %v1738 = vmul.f32 %v1735, %v1737
    %v1739 = vadd.f32 %v1735, %v1738
    %vm1740 = vweird.f32 %v1731
    %vm1741 = vweird.f32 %v1735
    %vm1742 = vmor %vm1740, %vm1741
    %v1743 = vsel %vm1742, %v1735, %v1739
    %v1744 = vand.u32 2147483647, %v1731
    %vm1745 = vcmp.eq.f32.partialorder %v1744, 8.507059e+37
    %v1746 = vand.u32 %v1731, 2147483648
    %v1747 = vor.u32 1.1754944e-38, %v1746
    %v1748 = vsel %vm1745, %v1747, %v1743
    %v1749 = vmul.f32 %v1726, %v1748
    %v1750 = vrcp.pop %v1734
    %v1751 = vmul.f32 %v1734, %v1750
    %v1752 = vsub.f32 1.0, %v1751
    %v1753 = vmul.f32 %v1750, %v1752
    %v1754 = vadd.f32 %v1750, %v1753
    %vm1755 = vweird.f32 %v1734
    %vm1756 = vweird.f32 %v1750
    %vm1757 = vmor %vm1755, %vm1756
    %v1758 = vsel %vm1757, %v1750, %v1754
    %v1759 = vand.u32 2147483647, %v1734
    %vm1760 = vcmp.eq.f32.partialorder %v1759, 8.507059e+37
    %v1761 = vand.u32 %v1734, 2147483648
    %v1762 = vor.u32 1.1754944e-38, %v1761
    %v1763 = vsel %vm1760, %v1762, %v1758
    %v1764 = vmul.f32 %v1728, %v1763
    %1765 = vrot.lane.b32.xlu0 %v1323, 104
    %v1766 = vpop.permute.xlu0 %1765
    %v1769 = vsel %vm160, %v1749, 0
    %v1772 = vsel %vm160, %v1764, 0
    %1774 = vmatpush.msra.mxu0 0.0
    %1775 = vmatpush.msra.mxu0 0.0
    %1776 = vmatpush.msra.mxu0 0.0
    %1777 = vmatpush.msra.mxu0 0.0
    %1778 = vmatpush.msra.mxu0 0.0
    %1779 = vmatpush.msra.mxu0 0.0
    %1780 = vmatpush.msra.mxu0 0.0
    %1781 = vmatpush.msra.mxu0 0.0
    %1782 = vmatpush.msra.mxu0 0.0
    %1783 = vmatpush.msra.mxu0 0.0
    %1784 = vmatpush.msra.mxu0 0.0
    %1785 = vmatpush.msra.mxu0 0.0
    %1786 = vmatpush.msra.mxu0 0.0
    %1787 = vmatpush.msra.mxu0 0.0
    %1788 = vmatpush.msra.mxu0 0.0
    %1789 = vmatpush.msra.mxu0 %v1766
    %1790 = vmatmul.f32.gmra.mxu0 %v1769
    %v1791 = vpop.f32.mrf.mxu0
    %v1792 = vadd.f32 0.0, %v1791
    %1793 = vmatmul.f32.gmra.mxu0 %v1772
    %v1794 = vpop.f32.mrf.mxu0
    %v1795 = vadd.f32 0.0, %v1794
    %1796 = vdwg.mxu0
    %1799 = vrot.lane.b32.xlu0 %v1792, 8
    %v1800 = vpop.permute.xlu0 %1799
    %1801 = vrot.lane.b32.xlu0 %v1795, 8
    %v1802 = vpop.permute.xlu0 %1801
    %v1805 = vsel %vm160, %v1675, %v1800
    %v1806 = vsel %vm160, %v1678, %v1802
    %v1807 = vperm.slane %v1242, 0
    %v1809 = vsel %vm132, %v1564, 0
    %v1812 = vsel %vm132, %v1565, 0
    %v1815 = vsel %vm132, %v1805, 0
    %v1818 = vsel %vm132, %v1806, 0
    %1820 = vmatpush.msra.mxu0 0.0
    %1821 = vmatpush.msra.mxu0 0.0
    %1822 = vmatpush.msra.mxu0 0.0
    %1823 = vmatpush.msra.mxu0 0.0
    %1824 = vmatpush.msra.mxu0 0.0
    %1825 = vmatpush.msra.mxu0 0.0
    %1826 = vmatpush.msra.mxu0 0.0
    %1827 = vmatpush.msra.mxu0 0.0
    %1828 = vmatpush.msra.mxu0 0.0
    %1829 = vmatpush.msra.mxu0 0.0
    %1830 = vmatpush.msra.mxu0 0.0
    %1831 = vmatpush.msra.mxu0 0.0
    %1832 = vmatpush.msra.mxu0 0.0
    %1833 = vmatpush.msra.mxu0 0.0
    %1834 = vmatpush.msra.mxu0 %v1239
    %1835 = vmatpush.msra.mxu0 %v1238
    %1836 = vmatmul.f32.gmra.mxu0 %v1809
    %v1837 = vpop.f32.mrf.mxu0
    %v1838 = vadd.f32 %v1807, %v1837
    %1839 = vmatmul.f32.gmra.mxu0 %v1812
    %v1840 = vpop.f32.mrf.mxu0
    %v1841 = vadd.f32 %v1807, %v1840
    %1842 = vmatmul.f32.gmra.mxu0 %v1815
    %v1843 = vpop.f32.mrf.mxu0
    %v1844 = vadd.f32 %v1807, %v1843
    %1845 = vmatmul.f32.gmra.mxu0 %v1818
    %v1846 = vpop.f32.mrf.mxu0
    %v1847 = vadd.f32 %v1807, %v1846
    %1848 = vdwg.mxu0
    %v1849 = vadd.f32 %v29, %v1838
    %v1850 = vadd.f32 %v30, %v1841
    %v1851 = vadd.f32 %v31, %v1844
    %v1852 = vadd.f32 %v32, %v1847
    %v1853 = vld [vmem:[%s5 + $0xe] sm:$0x1]
    %v1854 = vld [vmem:[%s5 + $0xf] sm:$0x1]
    %v1855 = vsel %vm61, %v1849, 0.0
    %1856 = vadd.xlane.f32.xlu0 %v1855
    %v1857 = vpop.xlane.xlu0 %1856
    %v1858 = vsel %vm61, %v1850, 0.0
    %1859 = vadd.xlane.f32.xlu0 %v1858
    %v1860 = vpop.xlane.xlu0 %1859
    %v1861 = vsel %vm61, %v1851, 0.0
    %1862 = vadd.xlane.f32.xlu0 %v1861
    %v1863 = vpop.xlane.xlu0 %1862
    %v1864 = vsel %vm61, %v1852, 0.0
    %1865 = vadd.xlane.f32.xlu0 %v1864
    %v1866 = vpop.xlane.xlu0 %1865
    %v1867 = vmul.f32 %v1857, %v502
    %v1868 = vmul.f32 %v1860, %v502
    %v1869 = vmul.f32 %v1863, %v502
    %v1870 = vmul.f32 %v1866, %v502
    %v1871 = vsub.f32 %v1849, %v1867
    %v1872 = vsub.f32 %v1850, %v1868
    %v1873 = vsub.f32 %v1851, %v1869
    %v1874 = vsub.f32 %v1852, %v1870
    %v1875 = vmul.f32 %v1871, %v1871
    %v1876 = vmul.f32 %v1872, %v1872
    %v1877 = vmul.f32 %v1873, %v1873
    %v1878 = vmul.f32 %v1874, %v1874
    %v1879 = vsel %vm61, %v1875, 0.0
    %1880 = vadd.xlane.f32.xlu0 %v1879
    %v1881 = vpop.xlane.xlu0 %1880
    %v1882 = vsel %vm61, %v1876, 0.0
    %1883 = vadd.xlane.f32.xlu0 %v1882
    %v1884 = vpop.xlane.xlu0 %1883
    %v1885 = vsel %vm61, %v1877, 0.0
    %1886 = vadd.xlane.f32.xlu0 %v1885
    %v1887 = vpop.xlane.xlu0 %1886
    %v1888 = vsel %vm61, %v1878, 0.0
    %1889 = vadd.xlane.f32.xlu0 %v1888
    %v1890 = vpop.xlane.xlu0 %1889
    %v1891 = vmul.f32 %v1881, %v502
    %v1892 = vmul.f32 %v1884, %v502
    %v1893 = vmul.f32 %v1887, %v502
    %v1894 = vmul.f32 %v1890, %v502
    %v1895 = vadd.f32 %v1891, 1e-05
    %v1896 = vadd.f32 %v1892, 1e-05
    %v1897 = vadd.f32 %v1893, 1e-05
    %v1898 = vadd.f32 %v1894, 1e-05
    %v1899 = vrsqrt.pop %v1895
    %v1900 = vmul.f32 %v1899, %v1895
    %v1901 = vmul.f32 %v1900, %v1899
    %v1902 = vmul.f32 0.5, %v1901
    %v1903 = vsub.f32 1.5, %v1902
    %v1904 = vmul.f32 %v1899, %v1903
    %vm1905 = vweird.f32 %v1895
    %vm1906 = vweird.f32 %v1899
    %vm1907 = vmor %vm1905, %vm1906
    %v1908 = vsel %vm1907, %v1899, %v1904
    %v1909 = vrsqrt.pop %v1896
    %v1910 = vmul.f32 %v1909, %v1896
    %v1911 = vmul.f32 %v1910, %v1909
    %v1912 = vmul.f32 0.5, %v1911
    %v1913 = vsub.f32 1.5, %v1912
    %v1914 = vmul.f32 %v1909, %v1913
    %vm1915 = vweird.f32 %v1896
    %vm1916 = vweird.f32 %v1909
    %vm1917 = vmor %vm1915, %vm1916
    %v1918 = vsel %vm1917, %v1909, %v1914
    %v1919 = vrsqrt.pop %v1897
    %v1920 = vmul.f32 %v1919, %v1897
    %v1921 = vmul.f32 %v1920, %v1919
    %v1922 = vmul.f32 0.5, %v1921
    %v1923 = vsub.f32 1.5, %v1922
    %v1924 = vmul.f32 %v1919, %v1923
    %vm1925 = vweird.f32 %v1897
    %vm1926 = vweird.f32 %v1919
    %vm1927 = vmor %vm1925, %vm1926
    %v1928 = vsel %vm1927, %v1919, %v1924
    %v1929 = vrsqrt.pop %v1898
    %v1930 = vmul.f32 %v1929, %v1898
    %v1931 = vmul.f32 %v1930, %v1929
    %v1932 = vmul.f32 0.5, %v1931
    %v1933 = vsub.f32 1.5, %v1932
    %v1934 = vmul.f32 %v1929, %v1933
    %vm1935 = vweird.f32 %v1898
    %vm1936 = vweird.f32 %v1929
    %vm1937 = vmor %vm1935, %vm1936
    %v1938 = vsel %vm1937, %v1929, %v1934
    %v1939 = vmul.f32 %v1871, %v1908
    %v1940 = vmul.f32 %v1872, %v1918
    %v1941 = vmul.f32 %v1873, %v1928
    %v1942 = vmul.f32 %v1874, %v1938
    %v1943 = vperm.slane %v1853, 0
    %v1944 = vmul.f32 %v1939, %v1943
    %v1945 = vmul.f32 %v1940, %v1943
    %v1946 = vmul.f32 %v1941, %v1943
    %v1947 = vmul.f32 %v1942, %v1943
    %v1948 = vperm.slane %v1854, 0
    %v1949 = vadd.f32 %v1944, %v1948
    %v1950 = vadd.f32 %v1945, %v1948
    %v1951 = vadd.f32 %v1946, %v1948
    %v1952 = vadd.f32 %v1947, %v1948
    %1953 = vst.msk [vmem:[#allocation2] sm:$0xff] %vm61, %v1222
    %1954 = vst.msk [vmem:[#allocation2 + $0x8] sm:$0xff] %vm61, %v1223
    %1955 = vst.msk [vmem:[#allocation4] sm:$0xff] %vm61, %v1949
    %1956 = vst.msk [vmem:[#allocation4 + $0x8] sm:$0xff] %vm61, %v1950
    %1957 = vst.msk [vmem:[#allocation4 + $0x10] sm:$0xff] %vm61, %v1951
    %1958 = vst.msk [vmem:[#allocation4 + $0x18] sm:$0xff] %vm61, %v1952
    // Predicated region
    $region26: #{two_way_attention_block.1} parent=1 // pred_check
      _
    $region27: #{two_way_attention_block.1} parent=1 // pred_check_branch
      %1960 = sbr.rel (0) target = $region29
    $region28: #{two_way_attention_block.1} parent=1 // pred_region
      %1962 = vsyncadd [#allocation3], 0
      %s1963 = sshll.u32 [#allocation2], 4
      %s1964 = int_to_ptr.vmem [resolvable:$true] %s1963
      %s1965 = sshll.u32 %s6, 4
      %s1966 = int_to_ptr.hbm [resolvable:$true] %s1965
      %1971 = dma.vmem_to_hbm [thread:$0]  %s1964, 256, %s1966, [#allocation3], 128, 128, 8
    $region29: #{two_way_attention_block.1} parent=1 // pred_fallthru
      _
    // Predicated region
    $region30: #{two_way_attention_block.1} parent=1 // pred_check
      _
    $region31: #{two_way_attention_block.1} parent=1 // pred_check_branch
      %1973 = sbr.rel (0) target = $region33
    $region32: #{two_way_attention_block.1} parent=1 // pred_region
      %1975 = vsyncadd [#allocation5], 0
      %s1976 = sshll.u32 [#allocation4], 4
      %s1977 = int_to_ptr.vmem [resolvable:$true] %s1976
      %s1978 = sshll.u32 %s7, 4
      %s1979 = int_to_ptr.hbm [resolvable:$true] %s1978
      %1984 = dma.vmem_to_hbm [thread:$0]  %s1977, 512, %s1979, [#allocation5], 128, 128, 8
    $region33: #{two_way_attention_block.1} parent=1 // pred_fallthru
      _
    // Predicated region
    $region34: #{two_way_attention_block.1} parent=1 // pred_check
      _
    $region35: #{two_way_attention_block.1} parent=1 // pred_check_branch
      %1986 = sbr.rel (0) target = $region37
    $region36: #{two_way_attention_block.1} parent=1 // pred_region
      %1988 = dma.done [#allocation3], 256
    $region37: #{two_way_attention_block.1} parent=1 // pred_fallthru
      _
    // Predicated region
    $region38: #{two_way_attention_block.1} parent=1 // pred_check
      _
    $region39: #{two_way_attention_block.1} parent=1 // pred_check_branch
      %1990 = sbr.rel (0) target = $region41
    $region40: #{two_way_attention_block.1} parent=1 // pred_region
      %1992 = dma.done [#allocation5], 512
    $region41: #{two_way_attention_block.1} parent=1 // pred_fallthru
      _
    %1993 = vsyncpa [#allocation3], 1
    %1994 = vsyncpa [#allocation5], 1

</llo_original>
